<compile_context>
chip_gen: v7x
topology: tpu7x:2x2x1
jax: 0.10.0
libtpu: 0.0.40
codegen_flags: <defaults>
</compile_context>

<pallas_src>
import functools

import jax
import jax.numpy as jnp
from jax.experimental import pallas as pl
from jax.experimental.pallas import tpu as pltpu

EPS = 1e-5  # torch.nn.LayerNorm default eps


def _layer_norm(v, gamma, beta):
    mu = jnp.mean(v, axis=-1, keepdims=True)
    var = jnp.mean((v - mu) ** 2, axis=-1, keepdims=True)
    return (v - mu) * jax.lax.rsqrt(var + EPS) * gamma + beta


def transformer_kernel(
    x_ref,
    g1_ref, be1_ref,
    wqkv_ref, bqkv_ref, wo_ref, bo_ref,
    g2_ref, be2_ref,
    w1_ref, bm1_ref, w2_ref, bm2_ref,
    out_ref,
    *, n_head,
):
    x = x_ref[0]                      # (N, F) f32
    N, F = x.shape

    # ---- ln1 ----
    x1 = _layer_norm(x, g1_ref[0], be1_ref[0])
    x1b = x1.astype(jnp.bfloat16)

    # ---- fused QKV projection: heads (and q/k/v) batched on the leading axis ----
    # wqkv: (3*n_head, F, D) bf16 with the scale already folded into the Q block.
    x1_rep = jnp.broadcast_to(x1b, (3 * n_head, N, F))
    qkv = jnp.einsum(
        "gnf,gfd->gnd", x1_rep, wqkv_ref[...],
        preferred_element_type=jnp.float32,
    ) + bqkv_ref[...]                 # (3H, N, D) f32
    q = qkv[:n_head]                  # (H, N, D)
    k = qkv[n_head:2 * n_head]
    v = qkv[2 * n_head:]

    # ---- attention, batched over heads (no lane slicing) ----
    s = jnp.einsum(
        "hqd,hkd->hqk", q.astype(jnp.bfloat16), k.astype(jnp.bfloat16),
        preferred_element_type=jnp.float32,
    )                                 # (H, N, N)
    s = s - jnp.max(s, axis=-1, keepdims=True)
    p = jnp.exp(s)
    o = jnp.einsum(
        "hqk,hkd->hqd", p.astype(jnp.bfloat16), v.astype(jnp.bfloat16),
        preferred_element_type=jnp.float32,
    )                                 # (H, N, D), un-normalized
    inv_denom = pl.reciprocal(jnp.sum(p, axis=-1, keepdims=True), approx=True)
    o = o * inv_denom                 # normalize rows after PV (smaller tile than (N,N))

    # ---- output projection: one batched matmul + single reduce over heads ----
    att_h = jnp.einsum(
        "hnd,hdf->hnf", o.astype(jnp.bfloat16), wo_ref[...],
        preferred_element_type=jnp.float32,
    )                                 # (H, N, F)
    att = att_h[0]
    for h in range(1, n_head):        # static, tiny reduce over the leading axis
        att = att + att_h[h]
    att = att + bo_ref[0]

    x = x + att                       # att_dropout == identity at inference

    # ---- ln2 + MLP + residual ----
    x2 = _layer_norm(x, g2_ref[0], be2_ref[0])
    h1 = jnp.maximum(
        jnp.dot(x2.astype(jnp.bfloat16), w1_ref[...],
                preferred_element_type=jnp.float32) + bm1_ref[0],
        0.0,
    )
    mlp_out = jnp.dot(h1.astype(jnp.bfloat16), w2_ref[...],
                      preferred_element_type=jnp.float32) + bm2_ref[0]

    out_ref[0] = (x + mlp_out).astype(out_ref.dtype)


def _prep_kernel_params(params, n_head):
    """Fuse/relayout the torch-style parameters for the kernel (all outside the kernel)."""
    F = params["wq"].shape[0]
    D = params["wq"].shape[1] // n_head
    scale = 1.0 / jnp.sqrt(jnp.float32(D))

    def w_heads(w):   # (F, H*D) -> (H, F, D)
        return jnp.transpose(w.reshape(F, n_head, D), (1, 0, 2))

    def b_heads(b):   # (1, H*D) -> (H, 1, D)
        return jnp.transpose(b.reshape(1, n_head, D), (1, 0, 2))

    wqkv = jnp.concatenate(
        [w_heads(params["wq"]) * scale, w_heads(params["wk"]), w_heads(params["wv"])],
        axis=0,
    ).astype(jnp.bfloat16)                                   # (3H, F, D)
    bqkv = jnp.concatenate(
        [b_heads(params["bq"]) * scale, b_heads(params["bk"]), b_heads(params["bv"])],
        axis=0,
    ).astype(jnp.float32)                                    # (3H, 1, D)
    wo_h = params["wo"].reshape(n_head, D, F).astype(jnp.bfloat16)   # (H, D, F)

    return [
        params["g1"], params["be1"],
        wqkv, bqkv, wo_h, params["bo"],
        params["g2"], params["be2"],
        params["w1"].astype(jnp.bfloat16), params["bm1"],
        params["w2"].astype(jnp.bfloat16), params["bm2"],
    ]


def transformer_forward(x, params, n_head):
    B, N, F = x.shape
    param_list = _prep_kernel_params(params, n_head)

    def full_spec(p):
        # replicated (grid-invariant) parameter: whole array as one block, same block per step
        return pl.BlockSpec(p.shape, lambda b, _nd=p.ndim: (0,) * _nd)

    in_specs = [pl.BlockSpec((1, N, F), lambda b: (b, 0, 0))] + [
        full_spec(p) for p in param_list
    ]
    out_specs = pl.BlockSpec((1, N, F), lambda b: (b, 0, 0))

    kernel = functools.partial(transformer_kernel, n_head=n_head)

    return pl.pallas_call(
        kernel,
        out_shape=jax.ShapeDtypeStruct((B, N, F), jnp.float32),
        grid=(B,),
        in_specs=in_specs,
        out_specs=out_specs,
        compiler_params=pltpu.CompilerParams(
            dimension_semantics=("parallel",),
            vmem_limit_bytes=32 * 1024 * 1024,
        ),
    )(x, *param_list)


def transformer_reference(x, params, n_head):
    """Pure-JAX f32 reference for correctness checking (original, unfused parameterization)."""
    head_dim = params["wq"].shape[1] // n_head
    out = []
    for b in range(x.shape[0]):
        xb = x[b]
        x1 = _layer_norm(xb, params["g1"][0], params["be1"][0])
        q = x1 @ params["wq"] + params["bq"][0]
        k = x1 @ params["wk"] + params["bk"][0]
        v = x1 @ params["wv"] + params["bv"][0]
        att = jnp.zeros_like(xb)
        for h in range(n_head):
            sl = slice(h * head_dim, (h + 1) * head_dim)
            s = (q[:, sl] @ k[:, sl].T) / jnp.sqrt(jnp.float32(head_dim))
            p = jax.nn.softmax(s, axis=-1)
            att = att + (p @ v[:, sl]) @ params["wo"][sl, :]
        att = att + params["bo"][0]
        xb = xb + att
        x2 = _layer_norm(xb, params["g2"][0], params["be2"][0])
        h1 = jnp.maximum(x2 @ params["w1"] + params["bm1"][0], 0.0)
        out.append(xb + (h1 @ params["w2"] + params["bm2"][0]))
    return jnp.stack(out)


def init_params(key, in_features, n_head, mlp_hidden):
    head_outdim = in_features // n_head
    qkv_dim = n_head * head_outdim
    ks = jax.random.split(key, 8)
    s = 0.02
    f32 = jnp.float32
    return {
        "g1": jnp.ones((1, in_features), f32),
        "be1": jnp.zeros((1, in_features), f32),
        "wq": s * jax.random.normal(ks[0], (in_features, qkv_dim), f32),
        "bq": jnp.zeros((1, qkv_dim), f32),
        "wk": s * jax.random.normal(ks[1], (in_features, qkv_dim), f32),
        "bk": jnp.zeros((1, qkv_dim), f32),
        "wv": s * jax.random.normal(ks[2], (in_features, qkv_dim), f32),
        "bv": jnp.zeros((1, qkv_dim), f32),
        "wo": s * jax.random.normal(ks[3], (qkv_dim, in_features), f32),
        "bo": jnp.zeros((1, in_features), f32),
        "g2": jnp.ones((1, in_features), f32),
        "be2": jnp.zeros((1, in_features), f32),
        "w1": s * jax.random.normal(ks[4], (in_features, mlp_hidden), f32),
        "bm1": jnp.zeros((1, mlp_hidden), f32),
        "w2": s * jax.random.normal(ks[5], (mlp_hidden, in_features), f32),
        "bm2": jnp.zeros((1, in_features), f32),
    }


if __name__ == "__main__":
    B, N, F = 2, 8, 32     # batch, sequence length, in_features
    n_head = 4
    mlp_hidden = 2 * F

    key = jax.random.PRNGKey(0)
    kx, kp = jax.random.split(key)
    x = jax.random.normal(kx, (B, N, F), jnp.float32)
    params = init_params(kp, F, n_head, mlp_hidden)

    out = transformer_forward(x, params, n_head)
    out = jax.block_until_ready(out)

    ref = transformer_reference(x, params, n_head)
    assert out.shape == (B, N, F)
    # bf16 MXU operands + approx reciprocal => compare against the f32 reference with a
    # correspondingly looser tolerance (observed error is ~1e-3).
    assert jnp.allclose(out, ref, atol=2e-2, rtol=2e-2), (
        "mismatch vs reference, max abs diff = %r" % float(jnp.max(jnp.abs(out - ref)))
    )

    print("KERNEL_OK")
</pallas_src>

<mosaic_0001>
module attributes {stable_mosaic.version = 11 : i64} {
  func.func @transformer_kernel(%arg0: i32, %arg1: memref<1x8x32xf32, #tpu.memory_space<vmem>>, %arg2: memref<1x32xf32, #tpu.memory_space<vmem>>, %arg3: memref<1x32xf32, #tpu.memory_space<vmem>>, %arg4: memref<12x32x8xbf16, #tpu.memory_space<vmem>>, %arg5: memref<12x1x8xf32, #tpu.memory_space<vmem>>, %arg6: memref<4x8x32xbf16, #tpu.memory_space<vmem>>, %arg7: memref<1x32xf32, #tpu.memory_space<vmem>>, %arg8: memref<1x32xf32, #tpu.memory_space<vmem>>, %arg9: memref<1x32xf32, #tpu.memory_space<vmem>>, %arg10: memref<32x64xbf16, #tpu.memory_space<vmem>>, %arg11: memref<1x64xf32, #tpu.memory_space<vmem>>, %arg12: memref<64x32xbf16, #tpu.memory_space<vmem>>, %arg13: memref<1x32xf32, #tpu.memory_space<vmem>>, %arg14: memref<1x8x32xf32, #tpu.memory_space<vmem>>) attributes {dimension_semantics = [#tpu.dimension_semantics<parallel>], iteration_bounds = array<i64: 2>, scalar_prefetch = 0 : i64, scratch_operands = 0 : i64, tpu.core_type = #tpu.core_type<tc>, window_params = [{transform_indices = @transform_0, window_bounds = array<i64: 1, 8, 32>}, {pipeline_mode = #tpu.pipeline_mode<synchronous>, transform_indices = @transform_1, window_bounds = array<i64: 1, 32>}, {pipeline_mode = #tpu.pipeline_mode<synchronous>, transform_indices = @transform_2, window_bounds = array<i64: 1, 32>}, {pipeline_mode = #tpu.pipeline_mode<synchronous>, transform_indices = @transform_3, window_bounds = array<i64: 12, 32, 8>}, {pipeline_mode = #tpu.pipeline_mode<synchronous>, transform_indices = @transform_4, window_bounds = array<i64: 12, 1, 8>}, {pipeline_mode = #tpu.pipeline_mode<synchronous>, transform_indices = @transform_5, window_bounds = array<i64: 4, 8, 32>}, {pipeline_mode = #tpu.pipeline_mode<synchronous>, transform_indices = @transform_6, window_bounds = array<i64: 1, 32>}, {pipeline_mode = #tpu.pipeline_mode<synchronous>, transform_indices = @transform_7, window_bounds = array<i64: 1, 32>}, {pipeline_mode = #tpu.pipeline_mode<synchronous>, transform_indices = @transform_8, window_bounds = array<i64: 1, 32>}, {pipeline_mode = #tpu.pipeline_mode<synchronous>, transform_indices = @transform_9, window_bounds = array<i64: 32, 64>}, {pipeline_mode = #tpu.pipeline_mode<synchronous>, transform_indices = @transform_10, window_bounds = array<i64: 1, 64>}, {pipeline_mode = #tpu.pipeline_mode<synchronous>, transform_indices = @transform_11, window_bounds = array<i64: 64, 32>}, {pipeline_mode = #tpu.pipeline_mode<synchronous>, transform_indices = @transform_12, window_bounds = array<i64: 1, 32>}, {transform_indices = @transform_13, window_bounds = array<i64: 1, 8, 32>}]} {
    %c0 = arith.constant 0 : index
    %c0_0 = arith.constant 0 : index
    %c0_1 = arith.constant 0 : index
    %0 = vector.load %arg1[%c0, %c0_0, %c0_1] : memref<1x8x32xf32, #tpu.memory_space<vmem>>, vector<1x8x32xf32>
    %1 = vector.shape_cast %0 : vector<1x8x32xf32> to vector<8x32xf32>
    %c0_2 = arith.constant 0 : index
    %c0_3 = arith.constant 0 : index
    %2 = vector.load %arg2[%c0_2, %c0_3] : memref<1x32xf32, #tpu.memory_space<vmem>>, vector<1x32xf32>
    %3 = vector.shape_cast %2 : vector<1x32xf32> to vector<32xf32>
    %c0_4 = arith.constant 0 : index
    %c0_5 = arith.constant 0 : index
    %4 = vector.load %arg3[%c0_4, %c0_5] : memref<1x32xf32, #tpu.memory_space<vmem>>, vector<1x32xf32>
    %5 = vector.shape_cast %4 : vector<1x32xf32> to vector<32xf32>
    %cst = arith.constant dense<0.000000e+00> : vector<8xf32>
    %6 = vector.multi_reduction <add>, %1, %cst [1] : vector<8x32xf32> to vector<8xf32>
    %7 = vector.shape_cast %6 : vector<8xf32> to vector<8x1xf32>
    %cst_6 = arith.constant 3.200000e+01 : f32
    %8 = vector.broadcast %cst_6 : f32 to vector<8x1xf32>
    %9 = arith.divf %7, %8 : vector<8x1xf32>
    %10 = vector.broadcast %9 : vector<8x1xf32> to vector<8x32xf32>
    %11 = arith.subf %1, %10 : vector<8x32xf32>
    %12 = arith.mulf %11, %11 : vector<8x32xf32>
    %cst_7 = arith.constant dense<0.000000e+00> : vector<8xf32>
    %13 = vector.multi_reduction <add>, %12, %cst_7 [1] : vector<8x32xf32> to vector<8xf32>
    %14 = vector.shape_cast %13 : vector<8xf32> to vector<8x1xf32>
    %cst_8 = arith.constant 3.200000e+01 : f32
    %15 = vector.broadcast %cst_8 : f32 to vector<8x1xf32>
    %16 = arith.divf %14, %15 : vector<8x1xf32>
    %17 = vector.broadcast %9 : vector<8x1xf32> to vector<8x32xf32>
    %18 = arith.subf %1, %17 : vector<8x32xf32>
    %cst_9 = arith.constant 9.99999974E-6 : f32
    %19 = vector.broadcast %cst_9 : f32 to vector<8x1xf32>
    %20 = arith.addf %16, %19 : vector<8x1xf32>
    %21 = math.rsqrt %20 : vector<8x1xf32>
    %22 = vector.broadcast %21 : vector<8x1xf32> to vector<8x32xf32>
    %23 = arith.mulf %18, %22 : vector<8x32xf32>
    %24 = vector.shape_cast %3 : vector<32xf32> to vector<1x32xf32>
    %25 = vector.broadcast %24 : vector<1x32xf32> to vector<8x32xf32>
    %26 = arith.mulf %23, %25 : vector<8x32xf32>
    %27 = vector.shape_cast %5 : vector<32xf32> to vector<1x32xf32>
    %28 = vector.broadcast %27 : vector<1x32xf32> to vector<8x32xf32>
    %29 = arith.addf %26, %28 : vector<8x32xf32>
    %30 = arith.truncf %29 : vector<8x32xf32> to vector<8x32xbf16>
    %31 = vector.shape_cast %30 : vector<8x32xbf16> to vector<1x8x32xbf16>
    %32 = vector.broadcast %31 : vector<1x8x32xbf16> to vector<12x8x32xbf16>
    %c0_10 = arith.constant 0 : index
    %c0_11 = arith.constant 0 : index
    %c0_12 = arith.constant 0 : index
    %33 = vector.load %arg4[%c0_10, %c0_11, %c0_12] : memref<12x32x8xbf16, #tpu.memory_space<vmem>>, vector<12x32x8xbf16>
    "tpu.trace_start"() <{level = 10 : i32, message = "gnf,gfd->gnd"}> : () -> ()
    %cst_13 = arith.constant dense<0.000000e+00> : vector<12x8x8xf32>
    %34 = tpu.matmul %32, %33, %cst_13 {dimension_numbers = #tpu.dot_dimension_numbers<[2], [1], [1], [2], [0, 0, 0, 1, 1, 2], [0], [0]>} : vector<12x8x32xbf16>, vector<12x32x8xbf16>, vector<12x8x8xf32> -> vector<12x8x8xf32>
    "tpu.trace_stop"() : () -> ()
    %c0_14 = arith.constant 0 : index
    %c0_15 = arith.constant 0 : index
    %c0_16 = arith.constant 0 : index
    %35 = vector.load %arg5[%c0_14, %c0_15, %c0_16] : memref<12x1x8xf32, #tpu.memory_space<vmem>>, vector<12x1x8xf32>
    %36 = vector.broadcast %35 : vector<12x1x8xf32> to vector<12x8x8xf32>
    %37 = arith.addf %34, %36 : vector<12x8x8xf32>
    %38 = vector.extract_strided_slice %37 {offsets = [0, 0, 0], sizes = [4, 8, 8], strides = [1, 1, 1]} : vector<12x8x8xf32> to vector<4x8x8xf32>
    %39 = vector.extract_strided_slice %37 {offsets = [4, 0, 0], sizes = [4, 8, 8], strides = [1, 1, 1]} : vector<12x8x8xf32> to vector<4x8x8xf32>
    %40 = vector.extract_strided_slice %37 {offsets = [8, 0, 0], sizes = [4, 8, 8], strides = [1, 1, 1]} : vector<12x8x8xf32> to vector<4x8x8xf32>
    %41 = arith.truncf %38 : vector<4x8x8xf32> to vector<4x8x8xbf16>
    %42 = arith.truncf %39 : vector<4x8x8xf32> to vector<4x8x8xbf16>
    "tpu.trace_start"() <{level = 10 : i32, message = "hqd,hkd->hqk"}> : () -> ()
    %cst_17 = arith.constant dense<0.000000e+00> : vector<4x8x8xf32>
    %43 = tpu.matmul %41, %42, %cst_17 {dimension_numbers = #tpu.dot_dimension_numbers<[2], [2], [1], [1], [0, 0, 0, 1, 1, 1], [0], [0]>} : vector<4x8x8xbf16>, vector<4x8x8xbf16>, vector<4x8x8xf32> -> vector<4x8x8xf32>
    "tpu.trace_stop"() : () -> ()
    %cst_18 = arith.constant dense<0xFF800000> : vector<4x8xf32>
    %44 = vector.multi_reduction <maximumf>, %43, %cst_18 [2] : vector<4x8x8xf32> to vector<4x8xf32>
    %45 = vector.shape_cast %44 : vector<4x8xf32> to vector<4x8x1xf32>
    %46 = vector.broadcast %45 : vector<4x8x1xf32> to vector<4x8x8xf32>
    %47 = arith.subf %43, %46 : vector<4x8x8xf32>
    %48 = math.exp %47 : vector<4x8x8xf32>
    %49 = arith.truncf %48 : vector<4x8x8xf32> to vector<4x8x8xbf16>
    %50 = arith.truncf %40 : vector<4x8x8xf32> to vector<4x8x8xbf16>
    "tpu.trace_start"() <{level = 10 : i32, message = "hqk,hkd->hqd"}> : () -> ()
    %cst_19 = arith.constant dense<0.000000e+00> : vector<4x8x8xf32>
    %51 = tpu.matmul %49, %50, %cst_19 {dimension_numbers = #tpu.dot_dimension_numbers<[2], [1], [1], [2], [0, 0, 0, 1, 1, 2], [0], [0]>} : vector<4x8x8xbf16>, vector<4x8x8xbf16>, vector<4x8x8xf32> -> vector<4x8x8xf32>
    "tpu.trace_stop"() : () -> ()
    %cst_20 = arith.constant dense<0.000000e+00> : vector<4x8xf32>
    %52 = vector.multi_reduction <add>, %48, %cst_20 [2] : vector<4x8x8xf32> to vector<4x8xf32>
    %53 = vector.shape_cast %52 : vector<4x8xf32> to vector<4x8x1xf32>
    %54 = tpu.reciprocal %53 {approx = true} : vector<4x8x1xf32> -> vector<4x8x1xf32>
    %55 = vector.broadcast %54 : vector<4x8x1xf32> to vector<4x8x8xf32>
    %56 = arith.mulf %51, %55 : vector<4x8x8xf32>
    %57 = arith.truncf %56 : vector<4x8x8xf32> to vector<4x8x8xbf16>
    %c0_21 = arith.constant 0 : index
    %c0_22 = arith.constant 0 : index
    %c0_23 = arith.constant 0 : index
    %58 = vector.load %arg6[%c0_21, %c0_22, %c0_23] : memref<4x8x32xbf16, #tpu.memory_space<vmem>>, vector<4x8x32xbf16>
    "tpu.trace_start"() <{level = 10 : i32, message = "hnd,hdf->hnf"}> : () -> ()
    %cst_24 = arith.constant dense<0.000000e+00> : vector<4x8x32xf32>
    %59 = tpu.matmul %57, %58, %cst_24 {dimension_numbers = #tpu.dot_dimension_numbers<[2], [1], [1], [2], [0, 0, 0, 1, 1, 2], [0], [0]>} : vector<4x8x8xbf16>, vector<4x8x32xbf16>, vector<4x8x32xf32> -> vector<4x8x32xf32>
    "tpu.trace_stop"() : () -> ()
    %60 = vector.extract_strided_slice %59 {offsets = [0, 0, 0], sizes = [1, 8, 32], strides = [1, 1, 1]} : vector<4x8x32xf32> to vector<1x8x32xf32>
    %61 = vector.shape_cast %60 : vector<1x8x32xf32> to vector<8x32xf32>
    %62 = vector.extract_strided_slice %59 {offsets = [1, 0, 0], sizes = [1, 8, 32], strides = [1, 1, 1]} : vector<4x8x32xf32> to vector<1x8x32xf32>
    %63 = vector.shape_cast %62 : vector<1x8x32xf32> to vector<8x32xf32>
    %64 = arith.addf %61, %63 : vector<8x32xf32>
    %65 = vector.extract_strided_slice %59 {offsets = [2, 0, 0], sizes = [1, 8, 32], strides = [1, 1, 1]} : vector<4x8x32xf32> to vector<1x8x32xf32>
    %66 = vector.shape_cast %65 : vector<1x8x32xf32> to vector<8x32xf32>
    %67 = arith.addf %64, %66 : vector<8x32xf32>
    %68 = vector.extract_strided_slice %59 {offsets = [3, 0, 0], sizes = [1, 8, 32], strides = [1, 1, 1]} : vector<4x8x32xf32> to vector<1x8x32xf32>
    %69 = vector.shape_cast %68 : vector<1x8x32xf32> to vector<8x32xf32>
    %70 = arith.addf %67, %69 : vector<8x32xf32>
    %c0_25 = arith.constant 0 : index
    %c0_26 = arith.constant 0 : index
    %71 = vector.load %arg7[%c0_25, %c0_26] : memref<1x32xf32, #tpu.memory_space<vmem>>, vector<1x32xf32>
    %72 = vector.shape_cast %71 : vector<1x32xf32> to vector<32xf32>
    %73 = vector.shape_cast %72 : vector<32xf32> to vector<1x32xf32>
    %74 = vector.broadcast %73 : vector<1x32xf32> to vector<8x32xf32>
    %75 = arith.addf %70, %74 : vector<8x32xf32>
    %76 = arith.addf %1, %75 : vector<8x32xf32>
    %c0_27 = arith.constant 0 : index
    %c0_28 = arith.constant 0 : index
    %77 = vector.load %arg8[%c0_27, %c0_28] : memref<1x32xf32, #tpu.memory_space<vmem>>, vector<1x32xf32>
    %78 = vector.shape_cast %77 : vector<1x32xf32> to vector<32xf32>
    %c0_29 = arith.constant 0 : index
    %c0_30 = arith.constant 0 : index
    %79 = vector.load %arg9[%c0_29, %c0_30] : memref<1x32xf32, #tpu.memory_space<vmem>>, vector<1x32xf32>
    %80 = vector.shape_cast %79 : vector<1x32xf32> to vector<32xf32>
    %cst_31 = arith.constant dense<0.000000e+00> : vector<8xf32>
    %81 = vector.multi_reduction <add>, %76, %cst_31 [1] : vector<8x32xf32> to vector<8xf32>
    %82 = vector.shape_cast %81 : vector<8xf32> to vector<8x1xf32>
    %cst_32 = arith.constant 3.200000e+01 : f32
    %83 = vector.broadcast %cst_32 : f32 to vector<8x1xf32>
    %84 = arith.divf %82, %83 : vector<8x1xf32>
    %85 = vector.broadcast %84 : vector<8x1xf32> to vector<8x32xf32>
    %86 = arith.subf %76, %85 : vector<8x32xf32>
    %87 = arith.mulf %86, %86 : vector<8x32xf32>
    %cst_33 = arith.constant dense<0.000000e+00> : vector<8xf32>
    %88 = vector.multi_reduction <add>, %87, %cst_33 [1] : vector<8x32xf32> to vector<8xf32>
    %89 = vector.shape_cast %88 : vector<8xf32> to vector<8x1xf32>
    %cst_34 = arith.constant 3.200000e+01 : f32
    %90 = vector.broadcast %cst_34 : f32 to vector<8x1xf32>
    %91 = arith.divf %89, %90 : vector<8x1xf32>
    %92 = vector.broadcast %84 : vector<8x1xf32> to vector<8x32xf32>
    %93 = arith.subf %76, %92 : vector<8x32xf32>
    %cst_35 = arith.constant 9.99999974E-6 : f32
    %94 = vector.broadcast %cst_35 : f32 to vector<8x1xf32>
    %95 = arith.addf %91, %94 : vector<8x1xf32>
    %96 = math.rsqrt %95 : vector<8x1xf32>
    %97 = vector.broadcast %96 : vector<8x1xf32> to vector<8x32xf32>
    %98 = arith.mulf %93, %97 : vector<8x32xf32>
    %99 = vector.shape_cast %78 : vector<32xf32> to vector<1x32xf32>
    %100 = vector.broadcast %99 : vector<1x32xf32> to vector<8x32xf32>
    %101 = arith.mulf %98, %100 : vector<8x32xf32>
    %102 = vector.shape_cast %80 : vector<32xf32> to vector<1x32xf32>
    %103 = vector.broadcast %102 : vector<1x32xf32> to vector<8x32xf32>
    %104 = arith.addf %101, %103 : vector<8x32xf32>
    %105 = arith.truncf %104 : vector<8x32xf32> to vector<8x32xbf16>
    %c0_36 = arith.constant 0 : index
    %c0_37 = arith.constant 0 : index
    %106 = vector.load %arg10[%c0_36, %c0_37] : memref<32x64xbf16, #tpu.memory_space<vmem>>, vector<32x64xbf16>
    %cst_38 = arith.constant dense<0.000000e+00> : vector<8x64xf32>
    %107 = tpu.matmul %105, %106, %cst_38 {dimension_numbers = #tpu.dot_dimension_numbers<[1], [0], [0], [1], [0, 0, 1, 1], [], []>} : vector<8x32xbf16>, vector<32x64xbf16>, vector<8x64xf32> -> vector<8x64xf32>
    %c0_39 = arith.constant 0 : index
    %c0_40 = arith.constant 0 : index
    %108 = vector.load %arg11[%c0_39, %c0_40] : memref<1x64xf32, #tpu.memory_space<vmem>>, vector<1x64xf32>
    %109 = vector.shape_cast %108 : vector<1x64xf32> to vector<64xf32>
    %110 = vector.shape_cast %109 : vector<64xf32> to vector<1x64xf32>
    %111 = vector.broadcast %110 : vector<1x64xf32> to vector<8x64xf32>
    %112 = arith.addf %107, %111 : vector<8x64xf32>
    %cst_41 = arith.constant 0.000000e+00 : f32
    %113 = vector.broadcast %cst_41 : f32 to vector<8x64xf32>
    %114 = arith.maximumf %112, %113 : vector<8x64xf32>
    %115 = arith.truncf %114 : vector<8x64xf32> to vector<8x64xbf16>
    %c0_42 = arith.constant 0 : index
    %c0_43 = arith.constant 0 : index
    %116 = vector.load %arg12[%c0_42, %c0_43] : memref<64x32xbf16, #tpu.memory_space<vmem>>, vector<64x32xbf16>
    %cst_44 = arith.constant dense<0.000000e+00> : vector<8x32xf32>
    %117 = tpu.matmul %115, %116, %cst_44 {dimension_numbers = #tpu.dot_dimension_numbers<[1], [0], [0], [1], [0, 0, 1, 1], [], []>} : vector<8x64xbf16>, vector<64x32xbf16>, vector<8x32xf32> -> vector<8x32xf32>
    %c0_45 = arith.constant 0 : index
    %c0_46 = arith.constant 0 : index
    %118 = vector.load %arg13[%c0_45, %c0_46] : memref<1x32xf32, #tpu.memory_space<vmem>>, vector<1x32xf32>
    %119 = vector.shape_cast %118 : vector<1x32xf32> to vector<32xf32>
    %120 = vector.shape_cast %119 : vector<32xf32> to vector<1x32xf32>
    %121 = vector.broadcast %120 : vector<1x32xf32> to vector<8x32xf32>
    %122 = arith.addf %117, %121 : vector<8x32xf32>
    %123 = arith.addf %76, %122 : vector<8x32xf32>
    %c0_47 = arith.constant 0 : index
    %c0_48 = arith.constant 0 : index
    %c0_49 = arith.constant 0 : index
    %124 = vector.load %arg14[%c0_47, %c0_48, %c0_49] : memref<1x8x32xf32, #tpu.memory_space<vmem>>, vector<1x8x32xf32>
    %125 = vector.shape_cast %124 : vector<1x8x32xf32> to vector<8x32xf32>
    %126 = vector.shape_cast %123 : vector<8x32xf32> to vector<1x8x32xf32>
    tpu.vector_store %arg14[%c0_47, %c0_48, %c0_49], %126 {strides = array<i32>} : memref<1x8x32xf32, #tpu.memory_space<vmem>>, vector<1x8x32xf32>,
    return
  }
  func.func @transform_0(%arg0: i32) -> (i32, i32, i32) {
    %c0_i32 = arith.constant 0 : i32
    %c0_i32_0 = arith.constant 0 : i32
    %c0_i32_1 = arith.constant 0 : i32
    return %arg0, %c0_i32, %c0_i32_0 : i32, i32, i32
  }
  func.func @transform_1(%arg0: i32) -> (i32, i32) {
    %c0_i32 = arith.constant 0 : i32
    %c0_i32_0 = arith.constant 0 : i32
    %c0_i32_1 = arith.constant 0 : i32
    return %c0_i32, %c0_i32_0 : i32, i32
  }
  func.func @transform_2(%arg0: i32) -> (i32, i32) {
    %c0_i32 = arith.constant 0 : i32
    %c0_i32_0 = arith.constant 0 : i32
    %c0_i32_1 = arith.constant 0 : i32
    return %c0_i32, %c0_i32_0 : i32, i32
  }
  func.func @transform_3(%arg0: i32) -> (i32, i32, i32) {
    %c0_i32 = arith.constant 0 : i32
    %c0_i32_0 = arith.constant 0 : i32
    %c0_i32_1 = arith.constant 0 : i32
    %c0_i32_2 = arith.constant 0 : i32
    return %c0_i32, %c0_i32_0, %c0_i32_1 : i32, i32, i32
  }
  func.func @transform_4(%arg0: i32) -> (i32, i32, i32) {
    %c0_i32 = arith.constant 0 : i32
    %c0_i32_0 = arith.constant 0 : i32
    %c0_i32_1 = arith.constant 0 : i32
    %c0_i32_2 = arith.constant 0 : i32
    return %c0_i32, %c0_i32_0, %c0_i32_1 : i32, i32, i32
  }
  func.func @transform_5(%arg0: i32) -> (i32, i32, i32) {
    %c0_i32 = arith.constant 0 : i32
    %c0_i32_0 = arith.constant 0 : i32
    %c0_i32_1 = arith.constant 0 : i32
    %c0_i32_2 = arith.constant 0 : i32
    return %c0_i32, %c0_i32_0, %c0_i32_1 : i32, i32, i32
  }
  func.func @transform_6(%arg0: i32) -> (i32, i32) {
    %c0_i32 = arith.constant 0 : i32
    %c0_i32_0 = arith.constant 0 : i32
    %c0_i32_1 = arith.constant 0 : i32
    return %c0_i32, %c0_i32_0 : i32, i32
  }
  func.func @transform_7(%arg0: i32) -> (i32, i32) {
    %c0_i32 = arith.constant 0 : i32
    %c0_i32_0 = arith.constant 0 : i32
    %c0_i32_1 = arith.constant 0 : i32
    return %c0_i32, %c0_i32_0 : i32, i32
  }
  func.func @transform_8(%arg0: i32) -> (i32, i32) {
    %c0_i32 = arith.constant 0 : i32
    %c0_i32_0 = arith.constant 0 : i32
    %c0_i32_1 = arith.constant 0 : i32
    return %c0_i32, %c0_i32_0 : i32, i32
  }
  func.func @transform_9(%arg0: i32) -> (i32, i32) {
    %c0_i32 = arith.constant 0 : i32
    %c0_i32_0 = arith.constant 0 : i32
    %c0_i32_1 = arith.constant 0 : i32
    return %c0_i32, %c0_i32_0 : i32, i32
  }
  func.func @transform_10(%arg0: i32) -> (i32, i32) {
    %c0_i32 = arith.constant 0 : i32
    %c0_i32_0 = arith.constant 0 : i32
    %c0_i32_1 = arith.constant 0 : i32
    return %c0_i32, %c0_i32_0 : i32, i32
  }
  func.func @transform_11(%arg0: i32) -> (i32, i32) {
    %c0_i32 = arith.constant 0 : i32
    %c0_i32_0 = arith.constant 0 : i32
    %c0_i32_1 = arith.constant 0 : i32
    return %c0_i32, %c0_i32_0 : i32, i32
  }
  func.func @transform_12(%arg0: i32) -> (i32, i32) {
    %c0_i32 = arith.constant 0 : i32
    %c0_i32_0 = arith.constant 0 : i32
    %c0_i32_1 = arith.constant 0 : i32
    return %c0_i32, %c0_i32_0 : i32, i32
  }
  func.func @transform_13(%arg0: i32) -> (i32, i32, i32) {
    %c0_i32 = arith.constant 0 : i32
    %c0_i32_0 = arith.constant 0 : i32
    %c0_i32_1 = arith.constant 0 : i32
    return %arg0, %c0_i32, %c0_i32_0 : i32, i32, i32
  }
}

</mosaic_0001>

<llo_original>
// kernel: tpu_custom_call.1
$region0: #{tpu_custom_call.1}
  #allocation0 [shape = 'u32[]', space=smem, size = 0x4, offset = 0x4, fixed_abs, tag = 'smem constant byte address 0x4 - core index']
  #allocation1 [shape = 'u32[144,128]{1,0:T(1,128)}', space=vmem, size = 0x12000, scoped, tag = 'internal scratch']
  %s0 = inlined_call_operand.vmem [shape: f32[2,8,32], index: 0, kind: input, shape index: {}]
  %s1 = inlined_call_operand.vmem [shape: f32[1,32], index: 1, kind: input, shape index: {}]
  %s2 = inlined_call_operand.vmem [shape: f32[1,32], index: 2, kind: input, shape index: {}]
  %s3 = inlined_call_operand.vmem [shape: bf16[12,32,8], index: 3, kind: input, shape index: {}]
  %s4 = inlined_call_operand.vmem [shape: f32[12,1,8], index: 4, kind: input, shape index: {}]
  %s5 = inlined_call_operand.vmem [shape: bf16[4,8,32], index: 5, kind: input, shape index: {}]
  %s6 = inlined_call_operand.vmem [shape: f32[1,32], index: 6, kind: input, shape index: {}]
  %s7 = inlined_call_operand.vmem [shape: f32[1,32], index: 7, kind: input, shape index: {}]
  %s8 = inlined_call_operand.vmem [shape: f32[1,32], index: 8, kind: input, shape index: {}]
  %s9 = inlined_call_operand.vmem [shape: bf16[32,64], index: 9, kind: input, shape index: {}]
  %s10 = inlined_call_operand.vmem [shape: f32[1,64], index: 10, kind: input, shape index: {}]
  %s11 = inlined_call_operand.vmem [shape: bf16[64,32], index: 11, kind: input, shape index: {}]
  %s12 = inlined_call_operand.vmem [shape: f32[1,32], index: 12, kind: input, shape index: {}]
  %s13 = inlined_call_operand.hbm [shape: f32[2,8,32], index: 13, kind: output, shape index: {}]
  %s14 = sld [smem:[#allocation0]]
  $region85: #{tpu_custom_call.1} parent=0
    _
  %s16 = ssub.s32 1, %s14
  %s17 = scalar_select 0, %s16, %s14
  $region1: #{tpu_custom_call.1} parent=0
    #allocation2 [shape = 'u8[8192]{0}', space=vmem, size = 0x2000, scoped, tag = 'output window, operand 0']
    #allocation3 [shape = 's32[2]{0}', space=sflag, size = 0x8, scoped, tag = 'scoped memory for tpu_custom_call.1']
    %18 = vsyncpa [#allocation3], 0
    %s19 = scalar_lea.sflag [#allocation3], 1
    %20 = vsyncpa %s19, 0
    loop: start=0, step=1, limit=4
    $region2: #{tpu_custom_call.1} parent=1 // loop_pre_header
      _
    $region3: #{tpu_custom_call.1} parent=1 // loop_header
      %s22 = sphi 0, %s26
      %p23 = scmp.ge.s32.totalorder %s22, 4
      %s32 = sphi 0, %s34
      %s35 = sphi 0, %s32
      %s36 = sphi 0, %s35
      %s52 = sphi 0, %s36
      %s56 = sphi 0, %s56
      %s58 = sphi 0, %s56
      %s59 = sphi 0, %s58
      %s73 = sphi 0, %s59
      %s77 = sphi 0, %s77
      %s79 = sphi 0, %s77
      %s80 = sphi 0, %s79
      %s94 = sphi 0, %s80
      %s98 = sphi 0, %s98
      %s100 = sphi 0, %s98
      %s101 = sphi 0, %s100
      %s115 = sphi 0, %s101
      %s119 = sphi 0, %s119
      %s121 = sphi 0, %s119
      %s122 = sphi 0, %s121
      %s136 = sphi 0, %s122
      %s140 = sphi 0, %s140
      %s142 = sphi 0, %s140
      %s143 = sphi 0, %s142
      %s157 = sphi 0, %s143
      %s161 = sphi 0, %s161
      %s163 = sphi 0, %s161
      %s164 = sphi 0, %s163
      %s178 = sphi 0, %s164
      %s182 = sphi 0, %s182
      %s184 = sphi 0, %s182
      %s185 = sphi 0, %s184
      %s199 = sphi 0, %s185
      %s203 = sphi 0, %s203
      %s205 = sphi 0, %s203
      %s206 = sphi 0, %s205
      %s220 = sphi 0, %s206
      %s224 = sphi 0, %s224
      %s226 = sphi 0, %s224
      %s227 = sphi 0, %s226
      %s241 = sphi 0, %s227
      %s245 = sphi 0, %s245
      %s247 = sphi 0, %s245
      %s248 = sphi 0, %s247
      %s262 = sphi 0, %s248
      %s266 = sphi 0, %s266
      %s268 = sphi 0, %s266
      %s269 = sphi 0, %s268
      %s283 = sphi 0, %s269
      %s287 = sphi 0, %s287
      %s289 = sphi 0, %s287
      %s290 = sphi 0, %s289
      %s304 = sphi 0, %s290
      %s310 = sphi 0, %s312
      %s313 = sphi 0, %s310
      %s314 = sphi 0, %s313
      %s330 = sphi 0, %s314
    $region4: #{tpu_custom_call.1} parent=1 // loop_header_branch
      %25 = sbr.rel (%p23) target = $region8
    $region5: #{tpu_custom_call.1} parent=1 // loop_body
      %s27 = ssub.s32 %s22, 1
      %s28 = ssub.s32 %s22, 2
      %s29 = sadd.s32 %s22, 1
      %s30 = ssub.s32 %s22, %s29
      %p31 = scmp.eq.s32.totalorder %s30, 0
      %s33 = sadd.s32 %s32, 1
      %s34 = scalar_select %p31, %s32, %s33
      %p37 = pneg %p31
      %p38 = scmp.eq.s32.totalorder %s22, 1
      %p39 = por %p37, %p38
      %p40 = scmp.ne.s32.totalorder %s32, %s35
      %p41 = scmp.eq.s32.totalorder %s22, 0
      %p42 = por %p40, %p41
      %p43 = scmp.ne.s32.totalorder %s32, %s35
      %p44 = scmp.eq.s32.totalorder %s27, 1
      %p45 = por %p43, %p44
      %p46 = scmp.ne.s32.totalorder %s35, %s36
      %p47 = scmp.eq.s32.totalorder %s27, 0
      %p48 = por %p46, %p47
      %p49 = scmp.ne.s32.totalorder %s35, %s36
      %p50 = scmp.eq.s32.totalorder %s28, 1
      %p51 = por %p49, %p50
      %p53 = scmp.ne.s32.totalorder %s36, %s52
      %p54 = scmp.eq.s32.totalorder %s28, 0
      %p55 = por %p53, %p54
      %s57 = sadd.s32 %s56, 1
      %p60 = scmp.eq.s32.totalorder %s22, 1
      %p61 = scmp.ne.s32.totalorder %s56, %s58
      %p62 = scmp.eq.s32.totalorder %s22, 0
      %p63 = por %p61, %p62
      %p64 = scmp.ne.s32.totalorder %s56, %s58
      %p65 = scmp.eq.s32.totalorder %s27, 1
      %p66 = por %p64, %p65
      %p67 = scmp.ne.s32.totalorder %s58, %s59
      %p68 = scmp.eq.s32.totalorder %s27, 0
      %p69 = por %p67, %p68
      %p70 = scmp.ne.s32.totalorder %s58, %s59
      %p71 = scmp.eq.s32.totalorder %s28, 1
      %p72 = por %p70, %p71
      %p74 = scmp.ne.s32.totalorder %s59, %s73
      %p75 = scmp.eq.s32.totalorder %s28, 0
      %p76 = por %p74, %p75
      %s78 = sadd.s32 %s77, 1
      %p81 = scmp.eq.s32.totalorder %s22, 1
      %p82 = scmp.ne.s32.totalorder %s77, %s79
      %p83 = scmp.eq.s32.totalorder %s22, 0
      %p84 = por %p82, %p83
      %p85 = scmp.ne.s32.totalorder %s77, %s79
      %p86 = scmp.eq.s32.totalorder %s27, 1
      %p87 = por %p85, %p86
      %p88 = scmp.ne.s32.totalorder %s79, %s80
      %p89 = scmp.eq.s32.totalorder %s27, 0
      %p90 = por %p88, %p89
      %p91 = scmp.ne.s32.totalorder %s79, %s80
      %p92 = scmp.eq.s32.totalorder %s28, 1
      %p93 = por %p91, %p92
      %p95 = scmp.ne.s32.totalorder %s80, %s94
      %p96 = scmp.eq.s32.totalorder %s28, 0
      %p97 = por %p95, %p96
      %s99 = sadd.s32 %s98, 1
      %p102 = scmp.eq.s32.totalorder %s22, 1
      %p103 = scmp.ne.s32.totalorder %s98, %s100
      %p104 = scmp.eq.s32.totalorder %s22, 0
      %p105 = por %p103, %p104
      %p106 = scmp.ne.s32.totalorder %s98, %s100
      %p107 = scmp.eq.s32.totalorder %s27, 1
      %p108 = por %p106, %p107
      %p109 = scmp.ne.s32.totalorder %s100, %s101
      %p110 = scmp.eq.s32.totalorder %s27, 0
      %p111 = por %p109, %p110
      %p112 = scmp.ne.s32.totalorder %s100, %s101
      %p113 = scmp.eq.s32.totalorder %s28, 1
      %p114 = por %p112, %p113
      %p116 = scmp.ne.s32.totalorder %s101, %s115
      %p117 = scmp.eq.s32.totalorder %s28, 0
      %p118 = por %p116, %p117
      %s120 = sadd.s32 %s119, 1
      %p123 = scmp.eq.s32.totalorder %s22, 1
      %p124 = scmp.ne.s32.totalorder %s119, %s121
      %p125 = scmp.eq.s32.totalorder %s22, 0
      %p126 = por %p124, %p125
      %p127 = scmp.ne.s32.totalorder %s119, %s121
      %p128 = scmp.eq.s32.totalorder %s27, 1
      %p129 = por %p127, %p128
      %p130 = scmp.ne.s32.totalorder %s121, %s122
      %p131 = scmp.eq.s32.totalorder %s27, 0
      %p132 = por %p130, %p131
      %p133 = scmp.ne.s32.totalorder %s121, %s122
      %p134 = scmp.eq.s32.totalorder %s28, 1
      %p135 = por %p133, %p134
      %p137 = scmp.ne.s32.totalorder %s122, %s136
      %p138 = scmp.eq.s32.totalorder %s28, 0
      %p139 = por %p137, %p138
      %s141 = sadd.s32 %s140, 1
      %p144 = scmp.eq.s32.totalorder %s22, 1
      %p145 = scmp.ne.s32.totalorder %s140, %s142
      %p146 = scmp.eq.s32.totalorder %s22, 0
      %p147 = por %p145, %p146
      %p148 = scmp.ne.s32.totalorder %s140, %s142
      %p149 = scmp.eq.s32.totalorder %s27, 1
      %p150 = por %p148, %p149
      %p151 = scmp.ne.s32.totalorder %s142, %s143
      %p152 = scmp.eq.s32.totalorder %s27, 0
      %p153 = por %p151, %p152
      %p154 = scmp.ne.s32.totalorder %s142, %s143
      %p155 = scmp.eq.s32.totalorder %s28, 1
      %p156 = por %p154, %p155
      %p158 = scmp.ne.s32.totalorder %s143, %s157
      %p159 = scmp.eq.s32.totalorder %s28, 0
      %p160 = por %p158, %p159
      %s162 = sadd.s32 %s161, 1
      %p165 = scmp.eq.s32.totalorder %s22, 1
      %p166 = scmp.ne.s32.totalorder %s161, %s163
      %p167 = scmp.eq.s32.totalorder %s22, 0
      %p168 = por %p166, %p167
      %p169 = scmp.ne.s32.totalorder %s161, %s163
      %p170 = scmp.eq.s32.totalorder %s27, 1
      %p171 = por %p169, %p170
      %p172 = scmp.ne.s32.totalorder %s163, %s164
      %p173 = scmp.eq.s32.totalorder %s27, 0
      %p174 = por %p172, %p173
      %p175 = scmp.ne.s32.totalorder %s163, %s164
      %p176 = scmp.eq.s32.totalorder %s28, 1
      %p177 = por %p175, %p176
      %p179 = scmp.ne.s32.totalorder %s164, %s178
      %p180 = scmp.eq.s32.totalorder %s28, 0
      %p181 = por %p179, %p180
      %s183 = sadd.s32 %s182, 1
      %p186 = scmp.eq.s32.totalorder %s22, 1
      %p187 = scmp.ne.s32.totalorder %s182, %s184
      %p188 = scmp.eq.s32.totalorder %s22, 0
      %p189 = por %p187, %p188
      %p190 = scmp.ne.s32.totalorder %s182, %s184
      %p191 = scmp.eq.s32.totalorder %s27, 1
      %p192 = por %p190, %p191
      %p193 = scmp.ne.s32.totalorder %s184, %s185
      %p194 = scmp.eq.s32.totalorder %s27, 0
      %p195 = por %p193, %p194
      %p196 = scmp.ne.s32.totalorder %s184, %s185
      %p197 = scmp.eq.s32.totalorder %s28, 1
      %p198 = por %p196, %p197
      %p200 = scmp.ne.s32.totalorder %s185, %s199
      %p201 = scmp.eq.s32.totalorder %s28, 0
      %p202 = por %p200, %p201
      %s204 = sadd.s32 %s203, 1
      %p207 = scmp.eq.s32.totalorder %s22, 1
      %p208 = scmp.ne.s32.totalorder %s203, %s205
      %p209 = scmp.eq.s32.totalorder %s22, 0
      %p210 = por %p208, %p209
      %p211 = scmp.ne.s32.totalorder %s203, %s205
      %p212 = scmp.eq.s32.totalorder %s27, 1
      %p213 = por %p211, %p212
      %p214 = scmp.ne.s32.totalorder %s205, %s206
      %p215 = scmp.eq.s32.totalorder %s27, 0
      %p216 = por %p214, %p215
      %p217 = scmp.ne.s32.totalorder %s205, %s206
      %p218 = scmp.eq.s32.totalorder %s28, 1
      %p219 = por %p217, %p218
      %p221 = scmp.ne.s32.totalorder %s206, %s220
      %p222 = scmp.eq.s32.totalorder %s28, 0
      %p223 = por %p221, %p222
      %s225 = sadd.s32 %s224, 1
      %p228 = scmp.eq.s32.totalorder %s22, 1
      %p229 = scmp.ne.s32.totalorder %s224, %s226
      %p230 = scmp.eq.s32.totalorder %s22, 0
      %p231 = por %p229, %p230
      %p232 = scmp.ne.s32.totalorder %s224, %s226
      %p233 = scmp.eq.s32.totalorder %s27, 1
      %p234 = por %p232, %p233
      %p235 = scmp.ne.s32.totalorder %s226, %s227
      %p236 = scmp.eq.s32.totalorder %s27, 0
      %p237 = por %p235, %p236
      %p238 = scmp.ne.s32.totalorder %s226, %s227
      %p239 = scmp.eq.s32.totalorder %s28, 1
      %p240 = por %p238, %p239
      %p242 = scmp.ne.s32.totalorder %s227, %s241
      %p243 = scmp.eq.s32.totalorder %s28, 0
      %p244 = por %p242, %p243
      %s246 = sadd.s32 %s245, 1
      %p249 = scmp.eq.s32.totalorder %s22, 1
      %p250 = scmp.ne.s32.totalorder %s245, %s247
      %p251 = scmp.eq.s32.totalorder %s22, 0
      %p252 = por %p250, %p251
      %p253 = scmp.ne.s32.totalorder %s245, %s247
      %p254 = scmp.eq.s32.totalorder %s27, 1
      %p255 = por %p253, %p254
      %p256 = scmp.ne.s32.totalorder %s247, %s248
      %p257 = scmp.eq.s32.totalorder %s27, 0
      %p258 = por %p256, %p257
      %p259 = scmp.ne.s32.totalorder %s247, %s248
      %p260 = scmp.eq.s32.totalorder %s28, 1
      %p261 = por %p259, %p260
      %p263 = scmp.ne.s32.totalorder %s248, %s262
      %p264 = scmp.eq.s32.totalorder %s28, 0
      %p265 = por %p263, %p264
      %s267 = sadd.s32 %s266, 1
      %p270 = scmp.eq.s32.totalorder %s22, 1
      %p271 = scmp.ne.s32.totalorder %s266, %s268
      %p272 = scmp.eq.s32.totalorder %s22, 0
      %p273 = por %p271, %p272
      %p274 = scmp.ne.s32.totalorder %s266, %s268
      %p275 = scmp.eq.s32.totalorder %s27, 1
      %p276 = por %p274, %p275
      %p277 = scmp.ne.s32.totalorder %s268, %s269
      %p278 = scmp.eq.s32.totalorder %s27, 0
      %p279 = por %p277, %p278
      %p280 = scmp.ne.s32.totalorder %s268, %s269
      %p281 = scmp.eq.s32.totalorder %s28, 1
      %p282 = por %p280, %p281
      %p284 = scmp.ne.s32.totalorder %s269, %s283
      %p285 = scmp.eq.s32.totalorder %s28, 0
      %p286 = por %p284, %p285
      %s288 = sadd.s32 %s287, 1
      %p291 = scmp.eq.s32.totalorder %s22, 1
      %p292 = scmp.ne.s32.totalorder %s287, %s289
      %p293 = scmp.eq.s32.totalorder %s22, 0
      %p294 = por %p292, %p293
      %p295 = scmp.ne.s32.totalorder %s287, %s289
      %p296 = scmp.eq.s32.totalorder %s27, 1
      %p297 = por %p295, %p296
      %p298 = scmp.ne.s32.totalorder %s289, %s290
      %p299 = scmp.eq.s32.totalorder %s27, 0
      %p300 = por %p298, %p299
      %p301 = scmp.ne.s32.totalorder %s289, %s290
      %p302 = scmp.eq.s32.totalorder %s28, 1
      %p303 = por %p301, %p302
      %p305 = scmp.ne.s32.totalorder %s290, %s304
      %p306 = scmp.eq.s32.totalorder %s28, 0
      %p307 = por %p305, %p306
      %s308 = ssub.s32 %s22, %s29
      %p309 = scmp.eq.s32.totalorder %s308, 0
      %s311 = sadd.s32 %s310, 1
      %s312 = scalar_select %p309, %s310, %s311
      %p315 = pneg %p309
      %p316 = scmp.eq.s32.totalorder %s22, 1
      %p317 = por %p315, %p316
      %p318 = scmp.ne.s32.totalorder %s310, %s313
      %p319 = scmp.eq.s32.totalorder %s22, 0
      %p320 = por %p318, %p319
      %p321 = scmp.ne.s32.totalorder %s310, %s313
      %p322 = scmp.eq.s32.totalorder %s27, 1
      %p323 = por %p321, %p322
      %p324 = scmp.ne.s32.totalorder %s313, %s314
      %p325 = scmp.eq.s32.totalorder %s27, 0
      %p326 = por %p324, %p325
      %p327 = scmp.ne.s32.totalorder %s313, %s314
      %p328 = scmp.eq.s32.totalorder %s28, 1
      %p329 = por %p327, %p328
      %p331 = scmp.ne.s32.totalorder %s314, %s330
      %p332 = scmp.eq.s32.totalorder %s28, 0
      %p333 = por %p331, %p332
      %p334 = scmp.le.s32.totalorder 1, %s22
      %p335 = scmp.lt.s32.totalorder %s22, 3
      %p336 = pnand %p334, %p335
      %p337 = pneg %p336
      // Predicated region
      $region9: #{tpu_custom_call.1} parent=5 // pred_check
        _
      $region10: #{tpu_custom_call.1} parent=5 // pred_check_branch
        %339 = sbr.rel (%p336) target = $region12
      $region11: #{tpu_custom_call.1} parent=5 // pred_region
        %s340 = ssub.s32 %s22, 1
        // Predicated region
        $region13: #{tpu_custom_call.1} parent=11 // pred_check
          %p341 = pneg %p69
        $region14: #{tpu_custom_call.1} parent=11 // pred_check_branch
          %343 = sbr.rel (%p341) target = $region16
        $region15: #{tpu_custom_call.1} parent=11 // pred_region
          _
        $region16: #{tpu_custom_call.1} parent=11 // pred_fallthru
          _
        // Predicated region
        $region17: #{tpu_custom_call.1} parent=11 // pred_check
          %p344 = pneg %p90
        $region18: #{tpu_custom_call.1} parent=11 // pred_check_branch
          %346 = sbr.rel (%p344) target = $region20
        $region19: #{tpu_custom_call.1} parent=11 // pred_region
          _
        $region20: #{tpu_custom_call.1} parent=11 // pred_fallthru
          _
        // Predicated region
        $region21: #{tpu_custom_call.1} parent=11 // pred_check
          %p347 = pneg %p111
        $region22: #{tpu_custom_call.1} parent=11 // pred_check_branch
          %349 = sbr.rel (%p347) target = $region24
        $region23: #{tpu_custom_call.1} parent=11 // pred_region
          _
        $region24: #{tpu_custom_call.1} parent=11 // pred_fallthru
          _
        // Predicated region
        $region25: #{tpu_custom_call.1} parent=11 // pred_check
          %p350 = pneg %p132
        $region26: #{tpu_custom_call.1} parent=11 // pred_check_branch
          %352 = sbr.rel (%p350) target = $region28
        $region27: #{tpu_custom_call.1} parent=11 // pred_region
          _
        $region28: #{tpu_custom_call.1} parent=11 // pred_fallthru
          _
        // Predicated region
        $region29: #{tpu_custom_call.1} parent=11 // pred_check
          %p353 = pneg %p153
        $region30: #{tpu_custom_call.1} parent=11 // pred_check_branch
          %355 = sbr.rel (%p353) target = $region32
        $region31: #{tpu_custom_call.1} parent=11 // pred_region
          _
        $region32: #{tpu_custom_call.1} parent=11 // pred_fallthru
          _
        // Predicated region
        $region33: #{tpu_custom_call.1} parent=11 // pred_check
          %p356 = pneg %p174
        $region34: #{tpu_custom_call.1} parent=11 // pred_check_branch
          %358 = sbr.rel (%p356) target = $region36
        $region35: #{tpu_custom_call.1} parent=11 // pred_region
          _
        $region36: #{tpu_custom_call.1} parent=11 // pred_fallthru
          _
        // Predicated region
        $region37: #{tpu_custom_call.1} parent=11 // pred_check
          %p359 = pneg %p195
        $region38: #{tpu_custom_call.1} parent=11 // pred_check_branch
          %361 = sbr.rel (%p359) target = $region40
        $region39: #{tpu_custom_call.1} parent=11 // pred_region
          _
        $region40: #{tpu_custom_call.1} parent=11 // pred_fallthru
          _
        // Predicated region
        $region41: #{tpu_custom_call.1} parent=11 // pred_check
          %p362 = pneg %p216
        $region42: #{tpu_custom_call.1} parent=11 // pred_check_branch
          %364 = sbr.rel (%p362) target = $region44
        $region43: #{tpu_custom_call.1} parent=11 // pred_region
          _
        $region44: #{tpu_custom_call.1} parent=11 // pred_fallthru
          _
        // Predicated region
        $region45: #{tpu_custom_call.1} parent=11 // pred_check
          %p365 = pneg %p237
        $region46: #{tpu_custom_call.1} parent=11 // pred_check_branch
          %367 = sbr.rel (%p365) target = $region48
        $region47: #{tpu_custom_call.1} parent=11 // pred_region
          _
        $region48: #{tpu_custom_call.1} parent=11 // pred_fallthru
          _
        // Predicated region
        $region49: #{tpu_custom_call.1} parent=11 // pred_check
          %p368 = pneg %p258
        $region50: #{tpu_custom_call.1} parent=11 // pred_check_branch
          %370 = sbr.rel (%p368) target = $region52
        $region51: #{tpu_custom_call.1} parent=11 // pred_region
          _
        $region52: #{tpu_custom_call.1} parent=11 // pred_fallthru
          _
        // Predicated region
        $region53: #{tpu_custom_call.1} parent=11 // pred_check
          %p371 = pneg %p279
        $region54: #{tpu_custom_call.1} parent=11 // pred_check_branch
          %373 = sbr.rel (%p371) target = $region56
        $region55: #{tpu_custom_call.1} parent=11 // pred_region
          _
        $region56: #{tpu_custom_call.1} parent=11 // pred_fallthru
          _
        // Predicated region
        $region57: #{tpu_custom_call.1} parent=11 // pred_check
          %p374 = pneg %p300
        $region58: #{tpu_custom_call.1} parent=11 // pred_check_branch
          %376 = sbr.rel (%p374) target = $region60
        $region59: #{tpu_custom_call.1} parent=11 // pred_region
          _
        $region60: #{tpu_custom_call.1} parent=11 // pred_fallthru
          _
      $region12: #{tpu_custom_call.1} parent=5 // pred_fallthru
        _
      %p377 = scmp.lt.s32.totalorder %s22, 2
      // Predicated region
      $region61: #{tpu_custom_call.1} parent=5 // pred_check
        %p378 = pneg %p377
      $region62: #{tpu_custom_call.1} parent=5 // pred_check_branch
        %380 = sbr.rel (%p378) target = $region64
      $region63: #{tpu_custom_call.1} parent=5 // pred_region
        // Predicated region
        $region65: #{tpu_custom_call.1} parent=63 // pred_check
          %p381 = pneg %p42
        $region66: #{tpu_custom_call.1} parent=63 // pred_check_branch
          %383 = sbr.rel (%p381) target = $region68
        $region67: #{tpu_custom_call.1} parent=63 // pred_region
          %p384 = scmp.lt.s32.totalorder %s22, 1
          %s385 = scalar_select %p384, %s22, 1
          %s386 = smul.addr %s385, 8
          %s387 = scalar_lea.vmem %s0, %s386
        $region68: #{tpu_custom_call.1} parent=63 // pred_fallthru
          _
      $region64: #{tpu_custom_call.1} parent=5 // pred_fallthru
        _
      %p388 = scmp.le.s32.totalorder 1, %s22
      %p389 = scmp.lt.s32.totalorder %s22, 3
      %p390 = pnand %p388, %p389
      %p391 = pneg %p390
      // Predicated region
      $region69: #{tpu_custom_call.1} parent=5 // pred_check
        _
      $region70: #{tpu_custom_call.1} parent=5 // pred_check_branch
        %393 = sbr.rel (%p390) target = $region72
      $region71: #{tpu_custom_call.1} parent=5 // pred_region
        %s394 = ssub.s32 %s22, 1
        %p395 = scmp.lt.s32.totalorder %s27, 1
        %s396 = scalar_select %p395, %s27, 1
        %s397 = smul.addr %s396, 8
        %s398 = scalar_lea.vmem %s0, %s397
        %p399 = pneg %p48
        %p400 = pneg %p45
        %p401 = pneg %p69
        %p402 = pneg %p66
        %p403 = pneg %p90
        %p404 = pneg %p87
        %p405 = pneg %p111
        %p406 = pneg %p108
        %p407 = pneg %p132
        %p408 = pneg %p129
        %p409 = pneg %p153
        %p410 = pneg %p150
        %p411 = pneg %p174
        %p412 = pneg %p171
        %p413 = pneg %p195
        %p414 = pneg %p192
        %p415 = pneg %p216
        %p416 = pneg %p213
        %p417 = pneg %p237
        %p418 = pneg %p234
        %p419 = pneg %p258
        %p420 = pneg %p255
        %p421 = pneg %p279
        %p422 = pneg %p276
        %p423 = pneg %p300
        %p424 = pneg %p297
        %p425 = pneg %p326
        %p426 = pneg %p323
        %s427 = sand.u32 %s313, 1
        %s428 = scalar_lea.sflag [#allocation3], %s427
        %s429 = sand.u32 %s313, 1
        %s430 = smul.addr %s429, 8
        %s431 = scalar_lea.vmem [#allocation2], %s430
        %p432 = scmp.lt.s32.totalorder %s27, 1
        %s433 = scalar_select %p432, %s27, 1
        %s434 = smul.addr %s433, 8
        %s435 = scalar_lea.vmem %s0, %s434
        %v437 = vld [vmem:[%s435] sm:$0xff]
        %v438 = vld [vmem:[%s1] sm:$0x1]
        %v439 = vld [vmem:[%s2] sm:$0x1]
        %vm440 = vcmask 261120
        %v441 = vsel %vm440, %v437, 0.0
        %442 = vadd.xlane.f32.xlu0 %v441
        %v443 = vpop.xlane.xlu0 %442
        %v444 = vrcp.pop 32.0
        %v445 = vmul.f32 %v443, %v444
        %v446 = vsub.f32 %v437, %v445
        %v447 = vmul.f32 %v446, %v446
        %v448 = vsel %vm440, %v447, 0.0
        %449 = vadd.xlane.f32.xlu0 %v448
        %v450 = vpop.xlane.xlu0 %449
        %v451 = vmul.f32 %v450, %v444
        %v452 = vadd.f32 %v451, 1e-05
        %v453 = vrsqrt.pop %v452
        %v454 = vmul.f32 %v446, %v453
        %v456 = vlaneseq
        %v457 = vshrl.u32 %v456, 7
        %v458 = vsub.s32 0, %v457
        %v459 = vrot.slane %v438, %v458
        %v461 = vmul.f32 %v454, %v459
        %v463 = vlaneseq
        %v464 = vshrl.u32 %v463, 7
        %v465 = vsub.s32 0, %v464
        %v466 = vrot.slane %v439, %v465
        %v468 = vadd.f32 %v461, %v466
        %v469 = vpack.c.bf16 %v468, %v468
        %v470 = vld [vmem:[%s3] sm:$0xf]
        %v471 = vld [vmem:[%s3 + $0x4] sm:$0xf]
        %v472 = vld [vmem:[%s3 + $0x8] sm:$0xf]
        %v473 = vld [vmem:[%s3 + $0xc] sm:$0xf]
        %v474 = vld [vmem:[%s3 + $0x10] sm:$0xf]
        %v475 = vld [vmem:[%s3 + $0x14] sm:$0xf]
        %v476 = vld [vmem:[%s3 + $0x18] sm:$0xf]
        %v477 = vld [vmem:[%s3 + $0x1c] sm:$0xf]
        %v478 = vld [vmem:[%s3 + $0x20] sm:$0xf]
        %v479 = vld [vmem:[%s3 + $0x24] sm:$0xf]
        %v480 = vld [vmem:[%s3 + $0x28] sm:$0xf]
        %v481 = vld [vmem:[%s3 + $0x2c] sm:$0xf]
        %v482 = vld [vmem:[%s3 + $0x30] sm:$0xf]
        %v483 = vld [vmem:[%s3 + $0x34] sm:$0xf]
        %v484 = vld [vmem:[%s3 + $0x38] sm:$0xf]
        %v485 = vld [vmem:[%s3 + $0x3c] sm:$0xf]
        %v486 = vld [vmem:[%s3 + $0x40] sm:$0xf]
        %v487 = vld [vmem:[%s3 + $0x44] sm:$0xf]
        %v488 = vld [vmem:[%s3 + $0x48] sm:$0xf]
        %v489 = vld [vmem:[%s3 + $0x4c] sm:$0xf]
        %v490 = vld [vmem:[%s3 + $0x50] sm:$0xf]
        %v491 = vld [vmem:[%s3 + $0x54] sm:$0xf]
        %v492 = vld [vmem:[%s3 + $0x58] sm:$0xf]
        %v493 = vld [vmem:[%s3 + $0x5c] sm:$0xf]
        %v494 = vld [vmem:[%s3 + $0x60] sm:$0xf]
        %v495 = vld [vmem:[%s3 + $0x64] sm:$0xf]
        %v496 = vld [vmem:[%s3 + $0x68] sm:$0xf]
        %v497 = vld [vmem:[%s3 + $0x6c] sm:$0xf]
        %v498 = vld [vmem:[%s3 + $0x70] sm:$0xf]
        %v499 = vld [vmem:[%s3 + $0x74] sm:$0xf]
        %v500 = vld [vmem:[%s3 + $0x78] sm:$0xf]
        %v501 = vld [vmem:[%s3 + $0x7c] sm:$0xf]
        %v502 = vld [vmem:[%s3 + $0x80] sm:$0xf]
        %v503 = vld [vmem:[%s3 + $0x84] sm:$0xf]
        %v504 = vld [vmem:[%s3 + $0x88] sm:$0xf]
        %v505 = vld [vmem:[%s3 + $0x8c] sm:$0xf]
        %v506 = vld [vmem:[%s3 + $0x90] sm:$0xf]
        %v507 = vld [vmem:[%s3 + $0x94] sm:$0xf]
        %v508 = vld [vmem:[%s3 + $0x98] sm:$0xf]
        %v509 = vld [vmem:[%s3 + $0x9c] sm:$0xf]
        %v510 = vld [vmem:[%s3 + $0xa0] sm:$0xf]
        %v511 = vld [vmem:[%s3 + $0xa4] sm:$0xf]
        %v512 = vld [vmem:[%s3 + $0xa8] sm:$0xf]
        %v513 = vld [vmem:[%s3 + $0xac] sm:$0xf]
        %v514 = vld [vmem:[%s3 + $0xb0] sm:$0xf]
        %v515 = vld [vmem:[%s3 + $0xb4] sm:$0xf]
        %v516 = vld [vmem:[%s3 + $0xb8] sm:$0xf]
        %v517 = vld [vmem:[%s3 + $0xbc] sm:$0xf]
        %v518 = vld [vmem:[%s4] sm:$0x1]
        %v519 = vld [vmem:[%s4 + $0x1] sm:$0x1]
        %v520 = vld [vmem:[%s4 + $0x2] sm:$0x1]
        %v521 = vld [vmem:[%s4 + $0x3] sm:$0x1]
        %v522 = vld [vmem:[%s4 + $0x4] sm:$0x1]
        %v523 = vld [vmem:[%s4 + $0x5] sm:$0x1]
        %v524 = vld [vmem:[%s4 + $0x6] sm:$0x1]
        %v525 = vld [vmem:[%s4 + $0x7] sm:$0x1]
        %v526 = vld [vmem:[%s4 + $0x8] sm:$0x1]
        %v527 = vld [vmem:[%s4 + $0x9] sm:$0x1]
        %v528 = vld [vmem:[%s4 + $0xa] sm:$0x1]
        %v529 = vld [vmem:[%s4 + $0xb] sm:$0x1]
        %v542 = vlaneseq
        %v543 = vshrl.u32 %v542, 7
        %v544 = vsub.s32 0, %v543
        %v545 = vrot.slane %v518, %v544
        %v546 = vlaneseq
        %v547 = vshrl.u32 %v546, 7
        %v548 = vsub.s32 0, %v547
        %v549 = vrot.slane %v519, %v548
        %v550 = vlaneseq
        %v551 = vshrl.u32 %v550, 7
        %v552 = vsub.s32 0, %v551
        %v553 = vrot.slane %v520, %v552
        %v554 = vlaneseq
        %v555 = vshrl.u32 %v554, 7
        %v556 = vsub.s32 0, %v555
        %v557 = vrot.slane %v521, %v556
        %v558 = vlaneseq
        %v559 = vshrl.u32 %v558, 7
        %v560 = vsub.s32 0, %v559
        %v561 = vrot.slane %v522, %v560
        %v562 = vlaneseq
        %v563 = vshrl.u32 %v562, 7
        %v564 = vsub.s32 0, %v563
        %v565 = vrot.slane %v523, %v564
        %v566 = vlaneseq
        %v567 = vshrl.u32 %v566, 7
        %v568 = vsub.s32 0, %v567
        %v569 = vrot.slane %v524, %v568
        %v570 = vlaneseq
        %v571 = vshrl.u32 %v570, 7
        %v572 = vsub.s32 0, %v571
        %v573 = vrot.slane %v525, %v572
        %v574 = vlaneseq
        %v575 = vshrl.u32 %v574, 7
        %v576 = vsub.s32 0, %v575
        %v577 = vrot.slane %v526, %v576
        %v578 = vlaneseq
        %v579 = vshrl.u32 %v578, 7
        %v580 = vsub.s32 0, %v579
        %v581 = vrot.slane %v527, %v580
        %v582 = vlaneseq
        %v583 = vshrl.u32 %v582, 7
        %v584 = vsub.s32 0, %v583
        %v585 = vrot.slane %v528, %v584
        %v586 = vlaneseq
        %v587 = vshrl.u32 %v586, 7
        %v588 = vsub.s32 0, %v587
        %v589 = vrot.slane %v529, %v588
        %v606 = vunpack.c.l.b16 %v470
        %v607 = vunpack.c.l.b16 %v471
        %v608 = vunpack.c.l.b16 %v472
        %v609 = vunpack.c.l.b16 %v473
        %v610 = vpack.c.b16 %v607, %v606
        %v611 = vpack.c.b16 %v609, %v608
        %v615 = vsel %vm440, %v469, 0
        %617 = vmatprep.subr.bf16.mxu0 0
        %618 = vmatpush1.bf16.msra.mxu0 %v610
        %619 = vmatprep.subr.bf16.mxu0 0
        %620 = vmatpush1.bf16.msra.mxu0 %v611
        %621 = vmatprep.subr.bf16.mxu0 0
        %622 = vmatpush1.bf16.msra.mxu0 0
        %623 = vmatprep.subr.bf16.mxu0 0
        %624 = vmatpush1.bf16.msra.mxu0 0
        %625 = vmatprep.subr.bf16.mxu0 0
        %626 = vmatpush1.bf16.msra.mxu0 0
        %627 = vmatprep.subr.bf16.mxu0 0
        %628 = vmatpush1.bf16.msra.mxu0 0
        %629 = vmatprep.subr.bf16.mxu0 0
        %630 = vmatpush1.bf16.msra.mxu0 0
        %631 = vmatprep.subr.bf16.mxu0 0
        %632 = vmatpush1.bf16.msra.mxu0 0
        %633 = vmatprep.subr.bf16.mxu0 0
        %634 = vmatpush1.bf16.msra.mxu0 0
        %635 = vmatprep.subr.bf16.mxu0 0
        %636 = vmatpush1.bf16.msra.mxu0 0
        %637 = vmatprep.subr.bf16.mxu0 0
        %638 = vmatpush1.bf16.msra.mxu0 0
        %639 = vmatprep.subr.bf16.mxu0 0
        %640 = vmatpush1.bf16.msra.mxu0 0
        %641 = vmatprep.subr.bf16.mxu0 0
        %642 = vmatpush1.bf16.msra.mxu0 0
        %643 = vmatprep.subr.bf16.mxu0 0
        %644 = vmatpush1.bf16.msra.mxu0 0
        %645 = vmatprep.subr.bf16.mxu0 0
        %646 = vmatpush1.bf16.msra.mxu0 0
        %647 = vmatprep.subr.bf16.mxu0 0
        %648 = vmatpush1.bf16.msra.mxu0 0
        %649 = vmatprep.mubr.bf16.mxu0 0
        %650 = vmatmul.mubr.bf16.gmra.mrb[0].mxu0 %v615
        %v651 = vpop.f32.mrb[0].mxu0
        %v652 = vadd.f32 %v545, %v651
        %v653 = vpop.f32.mrb[0].mxu0
        %v654 = vpop.f32.mrb[0].mxu0
        %v655 = vpop.f32.mrb[0].mxu0
        %656 = vdwg.mxu0
        %v661 = vunpack.c.l.b16 %v474
        %v662 = vunpack.c.l.b16 %v475
        %v663 = vunpack.c.l.b16 %v476
        %v664 = vunpack.c.l.b16 %v477
        %v665 = vpack.c.b16 %v662, %v661
        %v666 = vpack.c.b16 %v664, %v663
        %669 = vmatprep.subr.bf16.mxu0 0
        %670 = vmatpush1.bf16.msra.mxu0 %v665
        %671 = vmatprep.subr.bf16.mxu0 0
        %672 = vmatpush1.bf16.msra.mxu0 %v666
        %673 = vmatprep.subr.bf16.mxu0 0
        %674 = vmatpush1.bf16.msra.mxu0 0
        %675 = vmatprep.subr.bf16.mxu0 0
        %676 = vmatpush1.bf16.msra.mxu0 0
        %677 = vmatprep.subr.bf16.mxu0 0
        %678 = vmatpush1.bf16.msra.mxu0 0
        %679 = vmatprep.subr.bf16.mxu0 0
        %680 = vmatpush1.bf16.msra.mxu0 0
        %681 = vmatprep.subr.bf16.mxu0 0
        %682 = vmatpush1.bf16.msra.mxu0 0
        %683 = vmatprep.subr.bf16.mxu0 0
        %684 = vmatpush1.bf16.msra.mxu0 0
        %685 = vmatprep.subr.bf16.mxu0 0
        %686 = vmatpush1.bf16.msra.mxu0 0
        %687 = vmatprep.subr.bf16.mxu0 0
        %688 = vmatpush1.bf16.msra.mxu0 0
        %689 = vmatprep.subr.bf16.mxu0 0
        %690 = vmatpush1.bf16.msra.mxu0 0
        %691 = vmatprep.subr.bf16.mxu0 0
        %692 = vmatpush1.bf16.msra.mxu0 0
        %693 = vmatprep.subr.bf16.mxu0 0
        %694 = vmatpush1.bf16.msra.mxu0 0
        %695 = vmatprep.subr.bf16.mxu0 0
        %696 = vmatpush1.bf16.msra.mxu0 0
        %697 = vmatprep.subr.bf16.mxu0 0
        %698 = vmatpush1.bf16.msra.mxu0 0
        %699 = vmatprep.subr.bf16.mxu0 0
        %700 = vmatpush1.bf16.msra.mxu0 0
        %701 = vmatprep.mubr.bf16.mxu0 0
        %702 = vmatmul.mubr.bf16.gmra.mrb[0].mxu0 %v615
        %v703 = vpop.f32.mrb[0].mxu0
        %v704 = vadd.f32 %v549, %v703
        %v705 = vpop.f32.mrb[0].mxu0
        %v706 = vpop.f32.mrb[0].mxu0
        %v707 = vpop.f32.mrb[0].mxu0
        %708 = vdwg.mxu0
        %v713 = vunpack.c.l.b16 %v478
        %v714 = vunpack.c.l.b16 %v479
        %v715 = vunpack.c.l.b16 %v480
        %v716 = vunpack.c.l.b16 %v481
        %v717 = vpack.c.b16 %v714, %v713
        %v718 = vpack.c.b16 %v716, %v715
        %721 = vmatprep.subr.bf16.mxu0 0
        %722 = vmatpush1.bf16.msra.mxu0 %v717
        %723 = vmatprep.subr.bf16.mxu0 0
        %724 = vmatpush1.bf16.msra.mxu0 %v718
        %725 = vmatprep.subr.bf16.mxu0 0
        %726 = vmatpush1.bf16.msra.mxu0 0
        %727 = vmatprep.subr.bf16.mxu0 0
        %728 = vmatpush1.bf16.msra.mxu0 0
        %729 = vmatprep.subr.bf16.mxu0 0
        %730 = vmatpush1.bf16.msra.mxu0 0
        %731 = vmatprep.subr.bf16.mxu0 0
        %732 = vmatpush1.bf16.msra.mxu0 0
        %733 = vmatprep.subr.bf16.mxu0 0
        %734 = vmatpush1.bf16.msra.mxu0 0
        %735 = vmatprep.subr.bf16.mxu0 0
        %736 = vmatpush1.bf16.msra.mxu0 0
        %737 = vmatprep.subr.bf16.mxu0 0
        %738 = vmatpush1.bf16.msra.mxu0 0
        %739 = vmatprep.subr.bf16.mxu0 0
        %740 = vmatpush1.bf16.msra.mxu0 0
        %741 = vmatprep.subr.bf16.mxu0 0
        %742 = vmatpush1.bf16.msra.mxu0 0
        %743 = vmatprep.subr.bf16.mxu0 0
        %744 = vmatpush1.bf16.msra.mxu0 0
        %745 = vmatprep.subr.bf16.mxu0 0
        %746 = vmatpush1.bf16.msra.mxu0 0
        %747 = vmatprep.subr.bf16.mxu0 0
        %748 = vmatpush1.bf16.msra.mxu0 0
        %749 = vmatprep.subr.bf16.mxu0 0
        %750 = vmatpush1.bf16.msra.mxu0 0
        %751 = vmatprep.subr.bf16.mxu0 0
        %752 = vmatpush1.bf16.msra.mxu0 0
        %753 = vmatprep.mubr.bf16.mxu0 0
        %754 = vmatmul.mubr.bf16.gmra.mrb[0].mxu0 %v615
        %v755 = vpop.f32.mrb[0].mxu0
        %v756 = vadd.f32 %v553, %v755
        %v757 = vpop.f32.mrb[0].mxu0
        %v758 = vpop.f32.mrb[0].mxu0
        %v759 = vpop.f32.mrb[0].mxu0
        %760 = vdwg.mxu0
        %v765 = vunpack.c.l.b16 %v482
        %v766 = vunpack.c.l.b16 %v483
        %v767 = vunpack.c.l.b16 %v484
        %v768 = vunpack.c.l.b16 %v485
        %v769 = vpack.c.b16 %v766, %v765
        %v770 = vpack.c.b16 %v768, %v767
        %773 = vmatprep.subr.bf16.mxu0 0
        %774 = vmatpush1.bf16.msra.mxu0 %v769
        %775 = vmatprep.subr.bf16.mxu0 0
        %776 = vmatpush1.bf16.msra.mxu0 %v770
        %777 = vmatprep.subr.bf16.mxu0 0
        %778 = vmatpush1.bf16.msra.mxu0 0
        %779 = vmatprep.subr.bf16.mxu0 0
        %780 = vmatpush1.bf16.msra.mxu0 0
        %781 = vmatprep.subr.bf16.mxu0 0
        %782 = vmatpush1.bf16.msra.mxu0 0
        %783 = vmatprep.subr.bf16.mxu0 0
        %784 = vmatpush1.bf16.msra.mxu0 0
        %785 = vmatprep.subr.bf16.mxu0 0
        %786 = vmatpush1.bf16.msra.mxu0 0
        %787 = vmatprep.subr.bf16.mxu0 0
        %788 = vmatpush1.bf16.msra.mxu0 0
        %789 = vmatprep.subr.bf16.mxu0 0
        %790 = vmatpush1.bf16.msra.mxu0 0
        %791 = vmatprep.subr.bf16.mxu0 0
        %792 = vmatpush1.bf16.msra.mxu0 0
        %793 = vmatprep.subr.bf16.mxu0 0
        %794 = vmatpush1.bf16.msra.mxu0 0
        %795 = vmatprep.subr.bf16.mxu0 0
        %796 = vmatpush1.bf16.msra.mxu0 0
        %797 = vmatprep.subr.bf16.mxu0 0
        %798 = vmatpush1.bf16.msra.mxu0 0
        %799 = vmatprep.subr.bf16.mxu0 0
        %800 = vmatpush1.bf16.msra.mxu0 0
        %801 = vmatprep.subr.bf16.mxu0 0
        %802 = vmatpush1.bf16.msra.mxu0 0
        %803 = vmatprep.subr.bf16.mxu0 0
        %804 = vmatpush1.bf16.msra.mxu0 0
        %805 = vmatprep.mubr.bf16.mxu0 0
        %806 = vmatmul.mubr.bf16.gmra.mrb[0].mxu0 %v615
        %v807 = vpop.f32.mrb[0].mxu0
        %v808 = vadd.f32 %v557, %v807
        %v809 = vpop.f32.mrb[0].mxu0
        %v810 = vpop.f32.mrb[0].mxu0
        %v811 = vpop.f32.mrb[0].mxu0
        %812 = vdwg.mxu0
        %v817 = vunpack.c.l.b16 %v486
        %v818 = vunpack.c.l.b16 %v487
        %v819 = vunpack.c.l.b16 %v488
        %v820 = vunpack.c.l.b16 %v489
        %v821 = vpack.c.b16 %v818, %v817
        %v822 = vpack.c.b16 %v820, %v819
        %825 = vmatprep.subr.bf16.mxu0 0
        %826 = vmatpush1.bf16.msra.mxu0 %v821
        %827 = vmatprep.subr.bf16.mxu0 0
        %828 = vmatpush1.bf16.msra.mxu0 %v822
        %829 = vmatprep.subr.bf16.mxu0 0
        %830 = vmatpush1.bf16.msra.mxu0 0
        %831 = vmatprep.subr.bf16.mxu0 0
        %832 = vmatpush1.bf16.msra.mxu0 0
        %833 = vmatprep.subr.bf16.mxu0 0
        %834 = vmatpush1.bf16.msra.mxu0 0
        %835 = vmatprep.subr.bf16.mxu0 0
        %836 = vmatpush1.bf16.msra.mxu0 0
        %837 = vmatprep.subr.bf16.mxu0 0
        %838 = vmatpush1.bf16.msra.mxu0 0
        %839 = vmatprep.subr.bf16.mxu0 0
        %840 = vmatpush1.bf16.msra.mxu0 0
        %841 = vmatprep.subr.bf16.mxu0 0
        %842 = vmatpush1.bf16.msra.mxu0 0
        %843 = vmatprep.subr.bf16.mxu0 0
        %844 = vmatpush1.bf16.msra.mxu0 0
        %845 = vmatprep.subr.bf16.mxu0 0
        %846 = vmatpush1.bf16.msra.mxu0 0
        %847 = vmatprep.subr.bf16.mxu0 0
        %848 = vmatpush1.bf16.msra.mxu0 0
        %849 = vmatprep.subr.bf16.mxu0 0
        %850 = vmatpush1.bf16.msra.mxu0 0
        %851 = vmatprep.subr.bf16.mxu0 0
        %852 = vmatpush1.bf16.msra.mxu0 0
        %853 = vmatprep.subr.bf16.mxu0 0
        %854 = vmatpush1.bf16.msra.mxu0 0
        %855 = vmatprep.subr.bf16.mxu0 0
        %856 = vmatpush1.bf16.msra.mxu0 0
        %857 = vmatprep.mubr.bf16.mxu0 0
        %858 = vmatmul.mubr.bf16.gmra.mrb[0].mxu0 %v615
        %v859 = vpop.f32.mrb[0].mxu0
        %v860 = vadd.f32 %v561, %v859
        %v861 = vpop.f32.mrb[0].mxu0
        %v862 = vpop.f32.mrb[0].mxu0
        %v863 = vpop.f32.mrb[0].mxu0
        %864 = vdwg.mxu0
        %v869 = vunpack.c.l.b16 %v490
        %v870 = vunpack.c.l.b16 %v491
        %v871 = vunpack.c.l.b16 %v492
        %v872 = vunpack.c.l.b16 %v493
        %v873 = vpack.c.b16 %v870, %v869
        %v874 = vpack.c.b16 %v872, %v871
        %877 = vmatprep.subr.bf16.mxu0 0
        %878 = vmatpush1.bf16.msra.mxu0 %v873
        %879 = vmatprep.subr.bf16.mxu0 0
        %880 = vmatpush1.bf16.msra.mxu0 %v874
        %881 = vmatprep.subr.bf16.mxu0 0
        %882 = vmatpush1.bf16.msra.mxu0 0
        %883 = vmatprep.subr.bf16.mxu0 0
        %884 = vmatpush1.bf16.msra.mxu0 0
        %885 = vmatprep.subr.bf16.mxu0 0
        %886 = vmatpush1.bf16.msra.mxu0 0
        %887 = vmatprep.subr.bf16.mxu0 0
        %888 = vmatpush1.bf16.msra.mxu0 0
        %889 = vmatprep.subr.bf16.mxu0 0
        %890 = vmatpush1.bf16.msra.mxu0 0
        %891 = vmatprep.subr.bf16.mxu0 0
        %892 = vmatpush1.bf16.msra.mxu0 0
        %893 = vmatprep.subr.bf16.mxu0 0
        %894 = vmatpush1.bf16.msra.mxu0 0
        %895 = vmatprep.subr.bf16.mxu0 0
        %896 = vmatpush1.bf16.msra.mxu0 0
        %897 = vmatprep.subr.bf16.mxu0 0
        %898 = vmatpush1.bf16.msra.mxu0 0
        %899 = vmatprep.subr.bf16.mxu0 0
        %900 = vmatpush1.bf16.msra.mxu0 0
        %901 = vmatprep.subr.bf16.mxu0 0
        %902 = vmatpush1.bf16.msra.mxu0 0
        %903 = vmatprep.subr.bf16.mxu0 0
        %904 = vmatpush1.bf16.msra.mxu0 0
        %905 = vmatprep.subr.bf16.mxu0 0
        %906 = vmatpush1.bf16.msra.mxu0 0
        %907 = vmatprep.subr.bf16.mxu0 0
        %908 = vmatpush1.bf16.msra.mxu0 0
        %909 = vmatprep.mubr.bf16.mxu0 0
        %910 = vmatmul.mubr.bf16.gmra.mrb[0].mxu0 %v615
        %v911 = vpop.f32.mrb[0].mxu0
        %v912 = vadd.f32 %v565, %v911
        %v913 = vpop.f32.mrb[0].mxu0
        %v914 = vpop.f32.mrb[0].mxu0
        %v915 = vpop.f32.mrb[0].mxu0
        %916 = vdwg.mxu0
        %v921 = vunpack.c.l.b16 %v494
        %v922 = vunpack.c.l.b16 %v495
        %v923 = vunpack.c.l.b16 %v496
        %v924 = vunpack.c.l.b16 %v497
        %v925 = vpack.c.b16 %v922, %v921
        %v926 = vpack.c.b16 %v924, %v923
        %929 = vmatprep.subr.bf16.mxu0 0
        %930 = vmatpush1.bf16.msra.mxu0 %v925
        %931 = vmatprep.subr.bf16.mxu0 0
        %932 = vmatpush1.bf16.msra.mxu0 %v926
        %933 = vmatprep.subr.bf16.mxu0 0
        %934 = vmatpush1.bf16.msra.mxu0 0
        %935 = vmatprep.subr.bf16.mxu0 0
        %936 = vmatpush1.bf16.msra.mxu0 0
        %937 = vmatprep.subr.bf16.mxu0 0
        %938 = vmatpush1.bf16.msra.mxu0 0
        %939 = vmatprep.subr.bf16.mxu0 0
        %940 = vmatpush1.bf16.msra.mxu0 0
        %941 = vmatprep.subr.bf16.mxu0 0
        %942 = vmatpush1.bf16.msra.mxu0 0
        %943 = vmatprep.subr.bf16.mxu0 0
        %944 = vmatpush1.bf16.msra.mxu0 0
        %945 = vmatprep.subr.bf16.mxu0 0
        %946 = vmatpush1.bf16.msra.mxu0 0
        %947 = vmatprep.subr.bf16.mxu0 0
        %948 = vmatpush1.bf16.msra.mxu0 0
        %949 = vmatprep.subr.bf16.mxu0 0
        %950 = vmatpush1.bf16.msra.mxu0 0
        %951 = vmatprep.subr.bf16.mxu0 0
        %952 = vmatpush1.bf16.msra.mxu0 0
        %953 = vmatprep.subr.bf16.mxu0 0
        %954 = vmatpush1.bf16.msra.mxu0 0
        %955 = vmatprep.subr.bf16.mxu0 0
        %956 = vmatpush1.bf16.msra.mxu0 0
        %957 = vmatprep.subr.bf16.mxu0 0
        %958 = vmatpush1.bf16.msra.mxu0 0
        %959 = vmatprep.subr.bf16.mxu0 0
        %960 = vmatpush1.bf16.msra.mxu0 0
        %961 = vmatprep.mubr.bf16.mxu0 0
        %962 = vmatmul.mubr.bf16.gmra.mrb[0].mxu0 %v615
        %v963 = vpop.f32.mrb[0].mxu0
        %v964 = vadd.f32 %v569, %v963
        %v965 = vpop.f32.mrb[0].mxu0
        %v966 = vpop.f32.mrb[0].mxu0
        %v967 = vpop.f32.mrb[0].mxu0
        %968 = vdwg.mxu0
        %v973 = vunpack.c.l.b16 %v498
        %v974 = vunpack.c.l.b16 %v499
        %v975 = vunpack.c.l.b16 %v500
        %v976 = vunpack.c.l.b16 %v501
        %v977 = vpack.c.b16 %v974, %v973
        %v978 = vpack.c.b16 %v976, %v975
        %981 = vmatprep.subr.bf16.mxu0 0
        %982 = vmatpush1.bf16.msra.mxu0 %v977
        %983 = vmatprep.subr.bf16.mxu0 0
        %984 = vmatpush1.bf16.msra.mxu0 %v978
        %985 = vmatprep.subr.bf16.mxu0 0
        %986 = vmatpush1.bf16.msra.mxu0 0
        %987 = vmatprep.subr.bf16.mxu0 0
        %988 = vmatpush1.bf16.msra.mxu0 0
        %989 = vmatprep.subr.bf16.mxu0 0
        %990 = vmatpush1.bf16.msra.mxu0 0
        %991 = vmatprep.subr.bf16.mxu0 0
        %992 = vmatpush1.bf16.msra.mxu0 0
        %993 = vmatprep.subr.bf16.mxu0 0
        %994 = vmatpush1.bf16.msra.mxu0 0
        %995 = vmatprep.subr.bf16.mxu0 0
        %996 = vmatpush1.bf16.msra.mxu0 0
        %997 = vmatprep.subr.bf16.mxu0 0
        %998 = vmatpush1.bf16.msra.mxu0 0
        %999 = vmatprep.subr.bf16.mxu0 0
        %1000 = vmatpush1.bf16.msra.mxu0 0
        %1001 = vmatprep.subr.bf16.mxu0 0
        %1002 = vmatpush1.bf16.msra.mxu0 0
        %1003 = vmatprep.subr.bf16.mxu0 0
        %1004 = vmatpush1.bf16.msra.mxu0 0
        %1005 = vmatprep.subr.bf16.mxu0 0
        %1006 = vmatpush1.bf16.msra.mxu0 0
        %1007 = vmatprep.subr.bf16.mxu0 0
        %1008 = vmatpush1.bf16.msra.mxu0 0
        %1009 = vmatprep.subr.bf16.mxu0 0
        %1010 = vmatpush1.bf16.msra.mxu0 0
        %1011 = vmatprep.subr.bf16.mxu0 0
        %1012 = vmatpush1.bf16.msra.mxu0 0
        %1013 = vmatprep.mubr.bf16.mxu0 0
        %1014 = vmatmul.mubr.bf16.gmra.mrb[0].mxu0 %v615
        %v1015 = vpop.f32.mrb[0].mxu0
        %v1016 = vadd.f32 %v573, %v1015
        %v1017 = vpop.f32.mrb[0].mxu0
        %v1018 = vpop.f32.mrb[0].mxu0
        %v1019 = vpop.f32.mrb[0].mxu0
        %1020 = vdwg.mxu0
        %v1025 = vunpack.c.l.b16 %v502
        %v1026 = vunpack.c.l.b16 %v503
        %v1027 = vunpack.c.l.b16 %v504
        %v1028 = vunpack.c.l.b16 %v505
        %v1029 = vpack.c.b16 %v1026, %v1025
        %v1030 = vpack.c.b16 %v1028, %v1027
        %1033 = vmatprep.subr.bf16.mxu0 0
        %1034 = vmatpush1.bf16.msra.mxu0 %v1029
        %1035 = vmatprep.subr.bf16.mxu0 0
        %1036 = vmatpush1.bf16.msra.mxu0 %v1030
        %1037 = vmatprep.subr.bf16.mxu0 0
        %1038 = vmatpush1.bf16.msra.mxu0 0
        %1039 = vmatprep.subr.bf16.mxu0 0
        %1040 = vmatpush1.bf16.msra.mxu0 0
        %1041 = vmatprep.subr.bf16.mxu0 0
        %1042 = vmatpush1.bf16.msra.mxu0 0
        %1043 = vmatprep.subr.bf16.mxu0 0
        %1044 = vmatpush1.bf16.msra.mxu0 0
        %1045 = vmatprep.subr.bf16.mxu0 0
        %1046 = vmatpush1.bf16.msra.mxu0 0
        %1047 = vmatprep.subr.bf16.mxu0 0
        %1048 = vmatpush1.bf16.msra.mxu0 0
        %1049 = vmatprep.subr.bf16.mxu0 0
        %1050 = vmatpush1.bf16.msra.mxu0 0
        %1051 = vmatprep.subr.bf16.mxu0 0
        %1052 = vmatpush1.bf16.msra.mxu0 0
        %1053 = vmatprep.subr.bf16.mxu0 0
        %1054 = vmatpush1.bf16.msra.mxu0 0
        %1055 = vmatprep.subr.bf16.mxu0 0
        %1056 = vmatpush1.bf16.msra.mxu0 0
        %1057 = vmatprep.subr.bf16.mxu0 0
        %1058 = vmatpush1.bf16.msra.mxu0 0
        %1059 = vmatprep.subr.bf16.mxu0 0
        %1060 = vmatpush1.bf16.msra.mxu0 0
        %1061 = vmatprep.subr.bf16.mxu0 0
        %1062 = vmatpush1.bf16.msra.mxu0 0
        %1063 = vmatprep.subr.bf16.mxu0 0
        %1064 = vmatpush1.bf16.msra.mxu0 0
        %1065 = vmatprep.mubr.bf16.mxu0 0
        %1066 = vmatmul.mubr.bf16.gmra.mrb[0].mxu0 %v615
        %v1067 = vpop.f32.mrb[0].mxu0
        %v1068 = vadd.f32 %v577, %v1067
        %v1069 = vpop.f32.mrb[0].mxu0
        %v1070 = vpop.f32.mrb[0].mxu0
        %v1071 = vpop.f32.mrb[0].mxu0
        %1072 = vdwg.mxu0
        %v1077 = vunpack.c.l.b16 %v506
        %v1078 = vunpack.c.l.b16 %v507
        %v1079 = vunpack.c.l.b16 %v508
        %v1080 = vunpack.c.l.b16 %v509
        %v1081 = vpack.c.b16 %v1078, %v1077
        %v1082 = vpack.c.b16 %v1080, %v1079
        %1085 = vmatprep.subr.bf16.mxu0 0
        %1086 = vmatpush1.bf16.msra.mxu0 %v1081
        %1087 = vmatprep.subr.bf16.mxu0 0
        %1088 = vmatpush1.bf16.msra.mxu0 %v1082
        %1089 = vmatprep.subr.bf16.mxu0 0
        %1090 = vmatpush1.bf16.msra.mxu0 0
        %1091 = vmatprep.subr.bf16.mxu0 0
        %1092 = vmatpush1.bf16.msra.mxu0 0
        %1093 = vmatprep.subr.bf16.mxu0 0
        %1094 = vmatpush1.bf16.msra.mxu0 0
        %1095 = vmatprep.subr.bf16.mxu0 0
        %1096 = vmatpush1.bf16.msra.mxu0 0
        %1097 = vmatprep.subr.bf16.mxu0 0
        %1098 = vmatpush1.bf16.msra.mxu0 0
        %1099 = vmatprep.subr.bf16.mxu0 0
        %1100 = vmatpush1.bf16.msra.mxu0 0
        %1101 = vmatprep.subr.bf16.mxu0 0
        %1102 = vmatpush1.bf16.msra.mxu0 0
        %1103 = vmatprep.subr.bf16.mxu0 0
        %1104 = vmatpush1.bf16.msra.mxu0 0
        %1105 = vmatprep.subr.bf16.mxu0 0
        %1106 = vmatpush1.bf16.msra.mxu0 0
        %1107 = vmatprep.subr.bf16.mxu0 0
        %1108 = vmatpush1.bf16.msra.mxu0 0
        %1109 = vmatprep.subr.bf16.mxu0 0
        %1110 = vmatpush1.bf16.msra.mxu0 0
        %1111 = vmatprep.subr.bf16.mxu0 0
        %1112 = vmatpush1.bf16.msra.mxu0 0
        %1113 = vmatprep.subr.bf16.mxu0 0
        %1114 = vmatpush1.bf16.msra.mxu0 0
        %1115 = vmatprep.subr.bf16.mxu0 0
        %1116 = vmatpush1.bf16.msra.mxu0 0
        %1117 = vmatprep.mubr.bf16.mxu0 0
        %1118 = vmatmul.mubr.bf16.gmra.mrb[0].mxu0 %v615
        %v1119 = vpop.f32.mrb[0].mxu0
        %v1120 = vadd.f32 %v581, %v1119
        %v1121 = vpop.f32.mrb[0].mxu0
        %v1122 = vpop.f32.mrb[0].mxu0
        %v1123 = vpop.f32.mrb[0].mxu0
        %1124 = vdwg.mxu0
        %v1129 = vunpack.c.l.b16 %v510
        %v1130 = vunpack.c.l.b16 %v511
        %v1131 = vunpack.c.l.b16 %v512
        %v1132 = vunpack.c.l.b16 %v513
        %v1133 = vpack.c.b16 %v1130, %v1129
        %v1134 = vpack.c.b16 %v1132, %v1131
        %1137 = vmatprep.subr.bf16.mxu0 0
        %1138 = vmatpush1.bf16.msra.mxu0 %v1133
        %1139 = vmatprep.subr.bf16.mxu0 0
        %1140 = vmatpush1.bf16.msra.mxu0 %v1134
        %1141 = vmatprep.subr.bf16.mxu0 0
        %1142 = vmatpush1.bf16.msra.mxu0 0
        %1143 = vmatprep.subr.bf16.mxu0 0
        %1144 = vmatpush1.bf16.msra.mxu0 0
        %1145 = vmatprep.subr.bf16.mxu0 0
        %1146 = vmatpush1.bf16.msra.mxu0 0
        %1147 = vmatprep.subr.bf16.mxu0 0
        %1148 = vmatpush1.bf16.msra.mxu0 0
        %1149 = vmatprep.subr.bf16.mxu0 0
        %1150 = vmatpush1.bf16.msra.mxu0 0
        %1151 = vmatprep.subr.bf16.mxu0 0
        %1152 = vmatpush1.bf16.msra.mxu0 0
        %1153 = vmatprep.subr.bf16.mxu0 0
        %1154 = vmatpush1.bf16.msra.mxu0 0
        %1155 = vmatprep.subr.bf16.mxu0 0
        %1156 = vmatpush1.bf16.msra.mxu0 0
        %1157 = vmatprep.subr.bf16.mxu0 0
        %1158 = vmatpush1.bf16.msra.mxu0 0
        %1159 = vmatprep.subr.bf16.mxu0 0
        %1160 = vmatpush1.bf16.msra.mxu0 0
        %1161 = vmatprep.subr.bf16.mxu0 0
        %1162 = vmatpush1.bf16.msra.mxu0 0
        %1163 = vmatprep.subr.bf16.mxu0 0
        %1164 = vmatpush1.bf16.msra.mxu0 0
        %1165 = vmatprep.subr.bf16.mxu0 0
        %1166 = vmatpush1.bf16.msra.mxu0 0
        %1167 = vmatprep.subr.bf16.mxu0 0
        %1168 = vmatpush1.bf16.msra.mxu0 0
        %1169 = vmatprep.mubr.bf16.mxu0 0
        %1170 = vmatmul.mubr.bf16.gmra.mrb[0].mxu0 %v615
        %v1171 = vpop.f32.mrb[0].mxu0
        %v1172 = vadd.f32 %v585, %v1171
        %v1173 = vpop.f32.mrb[0].mxu0
        %v1174 = vpop.f32.mrb[0].mxu0
        %v1175 = vpop.f32.mrb[0].mxu0
        %1176 = vdwg.mxu0
        %v1181 = vunpack.c.l.b16 %v514
        %v1182 = vunpack.c.l.b16 %v515
        %v1183 = vunpack.c.l.b16 %v516
        %v1184 = vunpack.c.l.b16 %v517
        %v1185 = vpack.c.b16 %v1182, %v1181
        %v1186 = vpack.c.b16 %v1184, %v1183
        %1189 = vmatprep.subr.bf16.mxu0 0
        %1190 = vmatpush1.bf16.msra.mxu0 %v1185
        %1191 = vmatprep.subr.bf16.mxu0 0
        %1192 = vmatpush1.bf16.msra.mxu0 %v1186
        %1193 = vmatprep.subr.bf16.mxu0 0
        %1194 = vmatpush1.bf16.msra.mxu0 0
        %1195 = vmatprep.subr.bf16.mxu0 0
        %1196 = vmatpush1.bf16.msra.mxu0 0
        %1197 = vmatprep.subr.bf16.mxu0 0
        %1198 = vmatpush1.bf16.msra.mxu0 0
        %1199 = vmatprep.subr.bf16.mxu0 0
        %1200 = vmatpush1.bf16.msra.mxu0 0
        %1201 = vmatprep.subr.bf16.mxu0 0
        %1202 = vmatpush1.bf16.msra.mxu0 0
        %1203 = vmatprep.subr.bf16.mxu0 0
        %1204 = vmatpush1.bf16.msra.mxu0 0
        %1205 = vmatprep.subr.bf16.mxu0 0
        %1206 = vmatpush1.bf16.msra.mxu0 0
        %1207 = vmatprep.subr.bf16.mxu0 0
        %1208 = vmatpush1.bf16.msra.mxu0 0
        %1209 = vmatprep.subr.bf16.mxu0 0
        %1210 = vmatpush1.bf16.msra.mxu0 0
        %1211 = vmatprep.subr.bf16.mxu0 0
        %1212 = vmatpush1.bf16.msra.mxu0 0
        %1213 = vmatprep.subr.bf16.mxu0 0
        %1214 = vmatpush1.bf16.msra.mxu0 0
        %1215 = vmatprep.subr.bf16.mxu0 0
        %1216 = vmatpush1.bf16.msra.mxu0 0
        %1217 = vmatprep.subr.bf16.mxu0 0
        %1218 = vmatpush1.bf16.msra.mxu0 0
        %1219 = vmatprep.subr.bf16.mxu0 0
        %1220 = vmatpush1.bf16.msra.mxu0 0
        %1221 = vmatprep.mubr.bf16.mxu0 0
        %1222 = vmatmul.mubr.bf16.gmra.mrb[0].mxu0 %v615
        %v1223 = vpop.f32.mrb[0].mxu0
        %v1224 = vadd.f32 %v589, %v1223
        %v1225 = vpop.f32.mrb[0].mxu0
        %v1226 = vpop.f32.mrb[0].mxu0
        %v1227 = vpop.f32.mrb[0].mxu0
        %1228 = vdwg.mxu0
        %v1229 = vpack.c.bf16 %v652, %v652
        %v1230 = vpack.c.bf16 %v704, %v704
        %v1231 = vpack.c.bf16 %v756, %v756
        %v1232 = vpack.c.bf16 %v808, %v808
        %v1233 = vpack.c.bf16 %v860, %v860
        %v1234 = vpack.c.bf16 %v912, %v912
        %v1235 = vpack.c.bf16 %v964, %v964
        %v1236 = vpack.c.bf16 %v1016, %v1016
        %vm1237 = vcmask 64512
        %v1239 = vsel %vm1237, %v1229, 0
        %v1242 = vsel %vm1237, %v1233, 0
        %1244 = vmatprep.subr.bf16.mxu0 0
        %1245 = vmatpush1.bf16.xpose.msra.mxu0 %v1242
        %1246 = vmatprep.subr.bf16.mxu0 0
        %1247 = vmatpush1.bf16.xpose.msra.mxu0 0
        %1248 = vmatprep.subr.bf16.mxu0 0
        %1249 = vmatpush1.bf16.xpose.msra.mxu0 0
        %1250 = vmatprep.subr.bf16.mxu0 0
        %1251 = vmatpush1.bf16.xpose.msra.mxu0 0
        %1252 = vmatprep.subr.bf16.mxu0 0
        %1253 = vmatpush1.bf16.xpose.msra.mxu0 0
        %1254 = vmatprep.subr.bf16.mxu0 0
        %1255 = vmatpush1.bf16.xpose.msra.mxu0 0
        %1256 = vmatprep.subr.bf16.mxu0 0
        %1257 = vmatpush1.bf16.xpose.msra.mxu0 0
        %1258 = vmatprep.subr.bf16.mxu0 0
        %1259 = vmatpush1.bf16.xpose.msra.mxu0 0
        %1260 = vmatprep.subr.bf16.mxu0 0
        %1261 = vmatpush1.bf16.xpose.msra.mxu0 0
        %1262 = vmatprep.subr.bf16.mxu0 0
        %1263 = vmatpush1.bf16.xpose.msra.mxu0 0
        %1264 = vmatprep.subr.bf16.mxu0 0
        %1265 = vmatpush1.bf16.xpose.msra.mxu0 0
        %1266 = vmatprep.subr.bf16.mxu0 0
        %1267 = vmatpush1.bf16.xpose.msra.mxu0 0
        %1268 = vmatprep.subr.bf16.mxu0 0
        %1269 = vmatpush1.bf16.xpose.msra.mxu0 0
        %1270 = vmatprep.subr.bf16.mxu0 0
        %1271 = vmatpush1.bf16.xpose.msra.mxu0 0
        %1272 = vmatprep.subr.bf16.mxu0 0
        %1273 = vmatpush1.bf16.xpose.msra.mxu0 0
        %1274 = vmatprep.subr.bf16.mxu0 0
        %1275 = vmatpush1.bf16.xpose.msra.mxu0 0
        %1276 = vmatprep.mubr.bf16.mxu0 0
        %1277 = vmatmul.mubr.bf16.gmra.mrb[0].mxu0 %v1239
        %v1278 = vpop.f32.mrb[0].mxu0
        %v1279 = vadd.f32 0.0, %v1278
        %v1280 = vpop.f32.mrb[0].mxu0
        %v1281 = vpop.f32.mrb[0].mxu0
        %v1282 = vpop.f32.mrb[0].mxu0
        %1283 = vdwg.mxu0
        %v1285 = vsel %vm1237, %v1230, 0
        %v1288 = vsel %vm1237, %v1234, 0
        %1290 = vmatprep.subr.bf16.mxu0 0
        %1291 = vmatpush1.bf16.xpose.msra.mxu0 %v1288
        %1292 = vmatprep.subr.bf16.mxu0 0
        %1293 = vmatpush1.bf16.xpose.msra.mxu0 0
        %1294 = vmatprep.subr.bf16.mxu0 0
        %1295 = vmatpush1.bf16.xpose.msra.mxu0 0
        %1296 = vmatprep.subr.bf16.mxu0 0
        %1297 = vmatpush1.bf16.xpose.msra.mxu0 0
        %1298 = vmatprep.subr.bf16.mxu0 0
        %1299 = vmatpush1.bf16.xpose.msra.mxu0 0
        %1300 = vmatprep.subr.bf16.mxu0 0
        %1301 = vmatpush1.bf16.xpose.msra.mxu0 0
        %1302 = vmatprep.subr.bf16.mxu0 0
        %1303 = vmatpush1.bf16.xpose.msra.mxu0 0
        %1304 = vmatprep.subr.bf16.mxu0 0
        %1305 = vmatpush1.bf16.xpose.msra.mxu0 0
        %1306 = vmatprep.subr.bf16.mxu0 0
        %1307 = vmatpush1.bf16.xpose.msra.mxu0 0
        %1308 = vmatprep.subr.bf16.mxu0 0
        %1309 = vmatpush1.bf16.xpose.msra.mxu0 0
        %1310 = vmatprep.subr.bf16.mxu0 0
        %1311 = vmatpush1.bf16.xpose.msra.mxu0 0
        %1312 = vmatprep.subr.bf16.mxu0 0
        %1313 = vmatpush1.bf16.xpose.msra.mxu0 0
        %1314 = vmatprep.subr.bf16.mxu0 0
        %1315 = vmatpush1.bf16.xpose.msra.mxu0 0
        %1316 = vmatprep.subr.bf16.mxu0 0
        %1317 = vmatpush1.bf16.xpose.msra.mxu0 0
        %1318 = vmatprep.subr.bf16.mxu0 0
        %1319 = vmatpush1.bf16.xpose.msra.mxu0 0
        %1320 = vmatprep.subr.bf16.mxu0 0
        %1321 = vmatpush1.bf16.xpose.msra.mxu0 0
        %1322 = vmatprep.mubr.bf16.mxu0 0
        %1323 = vmatmul.mubr.bf16.gmra.mrb[0].mxu0 %v1285
        %v1324 = vpop.f32.mrb[0].mxu0
        %v1325 = vadd.f32 0.0, %v1324
        %v1326 = vpop.f32.mrb[0].mxu0
        %v1327 = vpop.f32.mrb[0].mxu0
        %v1328 = vpop.f32.mrb[0].mxu0
        %1329 = vdwg.mxu0
        %v1331 = vsel %vm1237, %v1231, 0
        %v1334 = vsel %vm1237, %v1235, 0
        %1336 = vmatprep.subr.bf16.mxu0 0
        %1337 = vmatpush1.bf16.xpose.msra.mxu0 %v1334
        %1338 = vmatprep.subr.bf16.mxu0 0
        %1339 = vmatpush1.bf16.xpose.msra.mxu0 0
        %1340 = vmatprep.subr.bf16.mxu0 0
        %1341 = vmatpush1.bf16.xpose.msra.mxu0 0
        %1342 = vmatprep.subr.bf16.mxu0 0
        %1343 = vmatpush1.bf16.xpose.msra.mxu0 0
        %1344 = vmatprep.subr.bf16.mxu0 0
        %1345 = vmatpush1.bf16.xpose.msra.mxu0 0
        %1346 = vmatprep.subr.bf16.mxu0 0
        %1347 = vmatpush1.bf16.xpose.msra.mxu0 0
        %1348 = vmatprep.subr.bf16.mxu0 0
        %1349 = vmatpush1.bf16.xpose.msra.mxu0 0
        %1350 = vmatprep.subr.bf16.mxu0 0
        %1351 = vmatpush1.bf16.xpose.msra.mxu0 0
        %1352 = vmatprep.subr.bf16.mxu0 0
        %1353 = vmatpush1.bf16.xpose.msra.mxu0 0
        %1354 = vmatprep.subr.bf16.mxu0 0
        %1355 = vmatpush1.bf16.xpose.msra.mxu0 0
        %1356 = vmatprep.subr.bf16.mxu0 0
        %1357 = vmatpush1.bf16.xpose.msra.mxu0 0
        %1358 = vmatprep.subr.bf16.mxu0 0
        %1359 = vmatpush1.bf16.xpose.msra.mxu0 0
        %1360 = vmatprep.subr.bf16.mxu0 0
        %1361 = vmatpush1.bf16.xpose.msra.mxu0 0
        %1362 = vmatprep.subr.bf16.mxu0 0
        %1363 = vmatpush1.bf16.xpose.msra.mxu0 0
        %1364 = vmatprep.subr.bf16.mxu0 0
        %1365 = vmatpush1.bf16.xpose.msra.mxu0 0
        %1366 = vmatprep.subr.bf16.mxu0 0
        %1367 = vmatpush1.bf16.xpose.msra.mxu0 0
        %1368 = vmatprep.mubr.bf16.mxu0 0
        %1369 = vmatmul.mubr.bf16.gmra.mrb[0].mxu0 %v1331
        %v1370 = vpop.f32.mrb[0].mxu0
        %v1371 = vadd.f32 0.0, %v1370
        %v1372 = vpop.f32.mrb[0].mxu0
        %v1373 = vpop.f32.mrb[0].mxu0
        %v1374 = vpop.f32.mrb[0].mxu0
        %1375 = vdwg.mxu0
        %v1377 = vsel %vm1237, %v1232, 0
        %v1380 = vsel %vm1237, %v1236, 0
        %1382 = vmatprep.subr.bf16.mxu0 0
        %1383 = vmatpush1.bf16.xpose.msra.mxu0 %v1380
        %1384 = vmatprep.subr.bf16.mxu0 0
        %1385 = vmatpush1.bf16.xpose.msra.mxu0 0
        %1386 = vmatprep.subr.bf16.mxu0 0
        %1387 = vmatpush1.bf16.xpose.msra.mxu0 0
        %1388 = vmatprep.subr.bf16.mxu0 0
        %1389 = vmatpush1.bf16.xpose.msra.mxu0 0
        %1390 = vmatprep.subr.bf16.mxu0 0
        %1391 = vmatpush1.bf16.xpose.msra.mxu0 0
        %1392 = vmatprep.subr.bf16.mxu0 0
        %1393 = vmatpush1.bf16.xpose.msra.mxu0 0
        %1394 = vmatprep.subr.bf16.mxu0 0
        %1395 = vmatpush1.bf16.xpose.msra.mxu0 0
        %1396 = vmatprep.subr.bf16.mxu0 0
        %1397 = vmatpush1.bf16.xpose.msra.mxu0 0
        %1398 = vmatprep.subr.bf16.mxu0 0
        %1399 = vmatpush1.bf16.xpose.msra.mxu0 0
        %1400 = vmatprep.subr.bf16.mxu0 0
        %1401 = vmatpush1.bf16.xpose.msra.mxu0 0
        %1402 = vmatprep.subr.bf16.mxu0 0
        %1403 = vmatpush1.bf16.xpose.msra.mxu0 0
        %1404 = vmatprep.subr.bf16.mxu0 0
        %1405 = vmatpush1.bf16.xpose.msra.mxu0 0
        %1406 = vmatprep.subr.bf16.mxu0 0
        %1407 = vmatpush1.bf16.xpose.msra.mxu0 0
        %1408 = vmatprep.subr.bf16.mxu0 0
        %1409 = vmatpush1.bf16.xpose.msra.mxu0 0
        %1410 = vmatprep.subr.bf16.mxu0 0
        %1411 = vmatpush1.bf16.xpose.msra.mxu0 0
        %1412 = vmatprep.subr.bf16.mxu0 0
        %1413 = vmatpush1.bf16.xpose.msra.mxu0 0
        %1414 = vmatprep.mubr.bf16.mxu0 0
        %1415 = vmatmul.mubr.bf16.gmra.mrb[0].mxu0 %v1377
        %v1416 = vpop.f32.mrb[0].mxu0
        %v1417 = vadd.f32 0.0, %v1416
        %v1418 = vpop.f32.mrb[0].mxu0
        %v1419 = vpop.f32.mrb[0].mxu0
        %v1420 = vpop.f32.mrb[0].mxu0
        %1421 = vdwg.mxu0
        %v1422 = vsel %vm1237, %v1279, -inf
        %1423 = vmax.xlane.f32.xlu0 %v1422
        %v1424 = vpop.xlane.xlu0 %1423
        %v1425 = vsel %vm1237, %v1325, -inf
        %1426 = vmax.xlane.f32.xlu0 %v1425
        %v1427 = vpop.xlane.xlu0 %1426
        %v1428 = vsel %vm1237, %v1371, -inf
        %1429 = vmax.xlane.f32.xlu0 %v1428
        %v1430 = vpop.xlane.xlu0 %1429
        %v1431 = vsel %vm1237, %v1417, -inf
        %1432 = vmax.xlane.f32.xlu0 %v1431
        %v1433 = vpop.xlane.xlu0 %1432
        %v1434 = vsub.f32 %v1279, %v1424
        %v1435 = vsub.f32 %v1325, %v1427
        %v1436 = vsub.f32 %v1371, %v1430
        %v1437 = vsub.f32 %v1417, %v1433
        %v1438 = vmul.f32 %v1434, 1.442695
        %v1439 = vpow.pop %v1438
        %v1440 = vmul.f32 %v1435, 1.442695
        %v1441 = vpow.pop %v1440
        %v1442 = vmul.f32 %v1436, 1.442695
        %v1443 = vpow.pop %v1442
        %v1444 = vmul.f32 %v1437, 1.442695
        %v1445 = vpow.pop %v1444
        %v1446 = vpack.c.bf16 %v1439, %v1439
        %v1447 = vpack.c.bf16 %v1441, %v1441
        %v1448 = vpack.c.bf16 %v1443, %v1443
        %v1449 = vpack.c.bf16 %v1445, %v1445
        %v1450 = vpack.c.bf16 %v1068, %v1068
        %v1451 = vpack.c.bf16 %v1120, %v1120
        %v1452 = vpack.c.bf16 %v1172, %v1172
        %v1453 = vpack.c.bf16 %v1224, %v1224
        %v1455 = vsel %vm1237, %v1446, 0
        %vm1457 = vcmask 1043456
        %v1459 = vsel %vm1457, %v1450, 0
        %1461 = vmatprep.subr.bf16.mxu0 0
        %1462 = vmatpush1.bf16.msra.mxu0 %v1459
        %1463 = vmatprep.subr.bf16.mxu0 0
        %1464 = vmatpush1.bf16.msra.mxu0 0
        %1465 = vmatprep.subr.bf16.mxu0 0
        %1466 = vmatpush1.bf16.msra.mxu0 0
        %1467 = vmatprep.subr.bf16.mxu0 0
        %1468 = vmatpush1.bf16.msra.mxu0 0
        %1469 = vmatprep.subr.bf16.mxu0 0
        %1470 = vmatpush1.bf16.msra.mxu0 0
        %1471 = vmatprep.subr.bf16.mxu0 0
        %1472 = vmatpush1.bf16.msra.mxu0 0
        %1473 = vmatprep.subr.bf16.mxu0 0
        %1474 = vmatpush1.bf16.msra.mxu0 0
        %1475 = vmatprep.subr.bf16.mxu0 0
        %1476 = vmatpush1.bf16.msra.mxu0 0
        %1477 = vmatprep.subr.bf16.mxu0 0
        %1478 = vmatpush1.bf16.msra.mxu0 0
        %1479 = vmatprep.subr.bf16.mxu0 0
        %1480 = vmatpush1.bf16.msra.mxu0 0
        %1481 = vmatprep.subr.bf16.mxu0 0
        %1482 = vmatpush1.bf16.msra.mxu0 0
        %1483 = vmatprep.subr.bf16.mxu0 0
        %1484 = vmatpush1.bf16.msra.mxu0 0
        %1485 = vmatprep.subr.bf16.mxu0 0
        %1486 = vmatpush1.bf16.msra.mxu0 0
        %1487 = vmatprep.subr.bf16.mxu0 0
        %1488 = vmatpush1.bf16.msra.mxu0 0
        %1489 = vmatprep.subr.bf16.mxu0 0
        %1490 = vmatpush1.bf16.msra.mxu0 0
        %1491 = vmatprep.subr.bf16.mxu0 0
        %1492 = vmatpush1.bf16.msra.mxu0 0
        %1493 = vmatprep.mubr.bf16.mxu0 0
        %1494 = vmatmul.mubr.bf16.gmra.mrb[0].mxu0 %v1455
        %v1495 = vpop.f32.mrb[0].mxu0
        %v1496 = vadd.f32 0.0, %v1495
        %v1497 = vpop.f32.mrb[0].mxu0
        %v1498 = vpop.f32.mrb[0].mxu0
        %v1499 = vpop.f32.mrb[0].mxu0
        %1500 = vdwg.mxu0
        %v1502 = vsel %vm1237, %v1447, 0
        %v1505 = vsel %vm1457, %v1451, 0
        %1507 = vmatprep.subr.bf16.mxu0 0
        %1508 = vmatpush1.bf16.msra.mxu0 %v1505
        %1509 = vmatprep.subr.bf16.mxu0 0
        %1510 = vmatpush1.bf16.msra.mxu0 0
        %1511 = vmatprep.subr.bf16.mxu0 0
        %1512 = vmatpush1.bf16.msra.mxu0 0
        %1513 = vmatprep.subr.bf16.mxu0 0
        %1514 = vmatpush1.bf16.msra.mxu0 0
        %1515 = vmatprep.subr.bf16.mxu0 0
        %1516 = vmatpush1.bf16.msra.mxu0 0
        %1517 = vmatprep.subr.bf16.mxu0 0
        %1518 = vmatpush1.bf16.msra.mxu0 0
        %1519 = vmatprep.subr.bf16.mxu0 0
        %1520 = vmatpush1.bf16.msra.mxu0 0
        %1521 = vmatprep.subr.bf16.mxu0 0
        %1522 = vmatpush1.bf16.msra.mxu0 0
        %1523 = vmatprep.subr.bf16.mxu0 0
        %1524 = vmatpush1.bf16.msra.mxu0 0
        %1525 = vmatprep.subr.bf16.mxu0 0
        %1526 = vmatpush1.bf16.msra.mxu0 0
        %1527 = vmatprep.subr.bf16.mxu0 0
        %1528 = vmatpush1.bf16.msra.mxu0 0
        %1529 = vmatprep.subr.bf16.mxu0 0
        %1530 = vmatpush1.bf16.msra.mxu0 0
        %1531 = vmatprep.subr.bf16.mxu0 0
        %1532 = vmatpush1.bf16.msra.mxu0 0
        %1533 = vmatprep.subr.bf16.mxu0 0
        %1534 = vmatpush1.bf16.msra.mxu0 0
        %1535 = vmatprep.subr.bf16.mxu0 0
        %1536 = vmatpush1.bf16.msra.mxu0 0
        %1537 = vmatprep.subr.bf16.mxu0 0
        %1538 = vmatpush1.bf16.msra.mxu0 0
        %1539 = vmatprep.mubr.bf16.mxu0 0
        %1540 = vmatmul.mubr.bf16.gmra.mrb[0].mxu0 %v1502
        %v1541 = vpop.f32.mrb[0].mxu0
        %v1542 = vadd.f32 0.0, %v1541
        %v1543 = vpop.f32.mrb[0].mxu0
        %v1544 = vpop.f32.mrb[0].mxu0
        %v1545 = vpop.f32.mrb[0].mxu0
        %1546 = vdwg.mxu0
        %v1548 = vsel %vm1237, %v1448, 0
        %v1551 = vsel %vm1457, %v1452, 0
        %1553 = vmatprep.subr.bf16.mxu0 0
        %1554 = vmatpush1.bf16.msra.mxu0 %v1551
        %1555 = vmatprep.subr.bf16.mxu0 0
        %1556 = vmatpush1.bf16.msra.mxu0 0
        %1557 = vmatprep.subr.bf16.mxu0 0
        %1558 = vmatpush1.bf16.msra.mxu0 0
        %1559 = vmatprep.subr.bf16.mxu0 0
        %1560 = vmatpush1.bf16.msra.mxu0 0
        %1561 = vmatprep.subr.bf16.mxu0 0
        %1562 = vmatpush1.bf16.msra.mxu0 0
        %1563 = vmatprep.subr.bf16.mxu0 0
        %1564 = vmatpush1.bf16.msra.mxu0 0
        %1565 = vmatprep.subr.bf16.mxu0 0
        %1566 = vmatpush1.bf16.msra.mxu0 0
        %1567 = vmatprep.subr.bf16.mxu0 0
        %1568 = vmatpush1.bf16.msra.mxu0 0
        %1569 = vmatprep.subr.bf16.mxu0 0
        %1570 = vmatpush1.bf16.msra.mxu0 0
        %1571 = vmatprep.subr.bf16.mxu0 0
        %1572 = vmatpush1.bf16.msra.mxu0 0
        %1573 = vmatprep.subr.bf16.mxu0 0
        %1574 = vmatpush1.bf16.msra.mxu0 0
        %1575 = vmatprep.subr.bf16.mxu0 0
        %1576 = vmatpush1.bf16.msra.mxu0 0
        %1577 = vmatprep.subr.bf16.mxu0 0
        %1578 = vmatpush1.bf16.msra.mxu0 0
        %1579 = vmatprep.subr.bf16.mxu0 0
        %1580 = vmatpush1.bf16.msra.mxu0 0
        %1581 = vmatprep.subr.bf16.mxu0 0
        %1582 = vmatpush1.bf16.msra.mxu0 0
        %1583 = vmatprep.subr.bf16.mxu0 0
        %1584 = vmatpush1.bf16.msra.mxu0 0
        %1585 = vmatprep.mubr.bf16.mxu0 0
        %1586 = vmatmul.mubr.bf16.gmra.mrb[0].mxu0 %v1548
        %v1587 = vpop.f32.mrb[0].mxu0
        %v1588 = vadd.f32 0.0, %v1587
        %v1589 = vpop.f32.mrb[0].mxu0
        %v1590 = vpop.f32.mrb[0].mxu0
        %v1591 = vpop.f32.mrb[0].mxu0
        %1592 = vdwg.mxu0
        %v1594 = vsel %vm1237, %v1449, 0
        %v1597 = vsel %vm1457, %v1453, 0
        %1599 = vmatprep.subr.bf16.mxu0 0
        %1600 = vmatpush1.bf16.msra.mxu0 %v1597
        %1601 = vmatprep.subr.bf16.mxu0 0
        %1602 = vmatpush1.bf16.msra.mxu0 0
        %1603 = vmatprep.subr.bf16.mxu0 0
        %1604 = vmatpush1.bf16.msra.mxu0 0
        %1605 = vmatprep.subr.bf16.mxu0 0
        %1606 = vmatpush1.bf16.msra.mxu0 0
        %1607 = vmatprep.subr.bf16.mxu0 0
        %1608 = vmatpush1.bf16.msra.mxu0 0
        %1609 = vmatprep.subr.bf16.mxu0 0
        %1610 = vmatpush1.bf16.msra.mxu0 0
        %1611 = vmatprep.subr.bf16.mxu0 0
        %1612 = vmatpush1.bf16.msra.mxu0 0
        %1613 = vmatprep.subr.bf16.mxu0 0
        %1614 = vmatpush1.bf16.msra.mxu0 0
        %1615 = vmatprep.subr.bf16.mxu0 0
        %1616 = vmatpush1.bf16.msra.mxu0 0
        %1617 = vmatprep.subr.bf16.mxu0 0
        %1618 = vmatpush1.bf16.msra.mxu0 0
        %1619 = vmatprep.subr.bf16.mxu0 0
        %1620 = vmatpush1.bf16.msra.mxu0 0
        %1621 = vmatprep.subr.bf16.mxu0 0
        %1622 = vmatpush1.bf16.msra.mxu0 0
        %1623 = vmatprep.subr.bf16.mxu0 0
        %1624 = vmatpush1.bf16.msra.mxu0 0
        %1625 = vmatprep.subr.bf16.mxu0 0
        %1626 = vmatpush1.bf16.msra.mxu0 0
        %1627 = vmatprep.subr.bf16.mxu0 0
        %1628 = vmatpush1.bf16.msra.mxu0 0
        %1629 = vmatprep.subr.bf16.mxu0 0
        %1630 = vmatpush1.bf16.msra.mxu0 0
        %1631 = vmatprep.mubr.bf16.mxu0 0
        %1632 = vmatmul.mubr.bf16.gmra.mrb[0].mxu0 %v1594
        %v1633 = vpop.f32.mrb[0].mxu0
        %v1634 = vadd.f32 0.0, %v1633
        %v1635 = vpop.f32.mrb[0].mxu0
        %v1636 = vpop.f32.mrb[0].mxu0
        %v1637 = vpop.f32.mrb[0].mxu0
        %1638 = vdwg.mxu0
        %v1639 = vsel %vm1237, %v1439, 0.0
        %1640 = vadd.xlane.f32.xlu0 %v1639
        %v1641 = vpop.xlane.xlu0 %1640
        %v1642 = vsel %vm1237, %v1441, 0.0
        %1643 = vadd.xlane.f32.xlu0 %v1642
        %v1644 = vpop.xlane.xlu0 %1643
        %v1645 = vsel %vm1237, %v1443, 0.0
        %1646 = vadd.xlane.f32.xlu0 %v1645
        %v1647 = vpop.xlane.xlu0 %1646
        %v1648 = vsel %vm1237, %v1445, 0.0
        %1649 = vadd.xlane.f32.xlu0 %v1648
        %v1650 = vpop.xlane.xlu0 %1649
        %v1651 = vrcp.pop %v1641
        %v1652 = vrcp.pop %v1644
        %v1653 = vrcp.pop %v1647
        %v1654 = vrcp.pop %v1650
        %v1655 = vmul.f32 %v1496, %v1651
        %v1656 = vmul.f32 %v1542, %v1652
        %v1657 = vmul.f32 %v1588, %v1653
        %v1658 = vmul.f32 %v1634, %v1654
        %v1659 = vpack.c.bf16 %v1655, %v1655
        %v1660 = vpack.c.bf16 %v1656, %v1656
        %v1661 = vpack.c.bf16 %v1657, %v1657
        %v1662 = vpack.c.bf16 %v1658, %v1658
        %v1663 = vld [vmem:[%s5] sm:$0xf]
        %v1664 = vld [vmem:[%s5 + $0x4] sm:$0xf]
        %v1665 = vld [vmem:[%s5 + $0x8] sm:$0xf]
        %v1666 = vld [vmem:[%s5 + $0xc] sm:$0xf]
        %v1668 = vsel %vm1237, %v1659, 0
        %v1671 = vsel %vm1457, %v1663, 0
        %1673 = vmatprep.subr.bf16.mxu0 0
        %1674 = vmatpush1.bf16.msra.mxu0 %v1671
        %1675 = vmatprep.subr.bf16.mxu0 0
        %1676 = vmatpush1.bf16.msra.mxu0 0
        %1677 = vmatprep.subr.bf16.mxu0 0
        %1678 = vmatpush1.bf16.msra.mxu0 0
        %1679 = vmatprep.subr.bf16.mxu0 0
        %1680 = vmatpush1.bf16.msra.mxu0 0
        %1681 = vmatprep.subr.bf16.mxu0 0
        %1682 = vmatpush1.bf16.msra.mxu0 0
        %1683 = vmatprep.subr.bf16.mxu0 0
        %1684 = vmatpush1.bf16.msra.mxu0 0
        %1685 = vmatprep.subr.bf16.mxu0 0
        %1686 = vmatpush1.bf16.msra.mxu0 0
        %1687 = vmatprep.subr.bf16.mxu0 0
        %1688 = vmatpush1.bf16.msra.mxu0 0
        %1689 = vmatprep.subr.bf16.mxu0 0
        %1690 = vmatpush1.bf16.msra.mxu0 0
        %1691 = vmatprep.subr.bf16.mxu0 0
        %1692 = vmatpush1.bf16.msra.mxu0 0
        %1693 = vmatprep.subr.bf16.mxu0 0
        %1694 = vmatpush1.bf16.msra.mxu0 0
        %1695 = vmatprep.subr.bf16.mxu0 0
        %1696 = vmatpush1.bf16.msra.mxu0 0
        %1697 = vmatprep.subr.bf16.mxu0 0
        %1698 = vmatpush1.bf16.msra.mxu0 0
        %1699 = vmatprep.subr.bf16.mxu0 0
        %1700 = vmatpush1.bf16.msra.mxu0 0
        %1701 = vmatprep.subr.bf16.mxu0 0
        %1702 = vmatpush1.bf16.msra.mxu0 0
        %1703 = vmatprep.subr.bf16.mxu0 0
        %1704 = vmatpush1.bf16.msra.mxu0 0
        %1705 = vmatprep.mubr.bf16.mxu0 0
        %1706 = vmatmul.mubr.bf16.gmra.mrb[0].mxu0 %v1668
        %v1707 = vpop.f32.mrb[0].mxu0
        %v1708 = vadd.f32 0.0, %v1707
        %v1709 = vpop.f32.mrb[0].mxu0
        %v1710 = vpop.f32.mrb[0].mxu0
        %v1711 = vpop.f32.mrb[0].mxu0
        %1712 = vdwg.mxu0
        %v1714 = vsel %vm1237, %v1660, 0
        %v1717 = vsel %vm1457, %v1664, 0
        %1719 = vmatprep.subr.bf16.mxu0 0
        %1720 = vmatpush1.bf16.msra.mxu0 %v1717
        %1721 = vmatprep.subr.bf16.mxu0 0
        %1722 = vmatpush1.bf16.msra.mxu0 0
        %1723 = vmatprep.subr.bf16.mxu0 0
        %1724 = vmatpush1.bf16.msra.mxu0 0
        %1725 = vmatprep.subr.bf16.mxu0 0
        %1726 = vmatpush1.bf16.msra.mxu0 0
        %1727 = vmatprep.subr.bf16.mxu0 0
        %1728 = vmatpush1.bf16.msra.mxu0 0
        %1729 = vmatprep.subr.bf16.mxu0 0
        %1730 = vmatpush1.bf16.msra.mxu0 0
        %1731 = vmatprep.subr.bf16.mxu0 0
        %1732 = vmatpush1.bf16.msra.mxu0 0
        %1733 = vmatprep.subr.bf16.mxu0 0
        %1734 = vmatpush1.bf16.msra.mxu0 0
        %1735 = vmatprep.subr.bf16.mxu0 0
        %1736 = vmatpush1.bf16.msra.mxu0 0
        %1737 = vmatprep.subr.bf16.mxu0 0
        %1738 = vmatpush1.bf16.msra.mxu0 0
        %1739 = vmatprep.subr.bf16.mxu0 0
        %1740 = vmatpush1.bf16.msra.mxu0 0
        %1741 = vmatprep.subr.bf16.mxu0 0
        %1742 = vmatpush1.bf16.msra.mxu0 0
        %1743 = vmatprep.subr.bf16.mxu0 0
        %1744 = vmatpush1.bf16.msra.mxu0 0
        %1745 = vmatprep.subr.bf16.mxu0 0
        %1746 = vmatpush1.bf16.msra.mxu0 0
        %1747 = vmatprep.subr.bf16.mxu0 0
        %1748 = vmatpush1.bf16.msra.mxu0 0
        %1749 = vmatprep.subr.bf16.mxu0 0
        %1750 = vmatpush1.bf16.msra.mxu0 0
        %1751 = vmatprep.mubr.bf16.mxu0 0
        %1752 = vmatmul.mubr.bf16.gmra.mrb[0].mxu0 %v1714
        %v1753 = vpop.f32.mrb[0].mxu0
        %v1754 = vadd.f32 0.0, %v1753
        %v1755 = vpop.f32.mrb[0].mxu0
        %v1756 = vpop.f32.mrb[0].mxu0
        %v1757 = vpop.f32.mrb[0].mxu0
        %1758 = vdwg.mxu0
        %v1760 = vsel %vm1237, %v1661, 0
        %v1763 = vsel %vm1457, %v1665, 0
        %1765 = vmatprep.subr.bf16.mxu0 0
        %1766 = vmatpush1.bf16.msra.mxu0 %v1763
        %1767 = vmatprep.subr.bf16.mxu0 0
        %1768 = vmatpush1.bf16.msra.mxu0 0
        %1769 = vmatprep.subr.bf16.mxu0 0
        %1770 = vmatpush1.bf16.msra.mxu0 0
        %1771 = vmatprep.subr.bf16.mxu0 0
        %1772 = vmatpush1.bf16.msra.mxu0 0
        %1773 = vmatprep.subr.bf16.mxu0 0
        %1774 = vmatpush1.bf16.msra.mxu0 0
        %1775 = vmatprep.subr.bf16.mxu0 0
        %1776 = vmatpush1.bf16.msra.mxu0 0
        %1777 = vmatprep.subr.bf16.mxu0 0
        %1778 = vmatpush1.bf16.msra.mxu0 0
        %1779 = vmatprep.subr.bf16.mxu0 0
        %1780 = vmatpush1.bf16.msra.mxu0 0
        %1781 = vmatprep.subr.bf16.mxu0 0
        %1782 = vmatpush1.bf16.msra.mxu0 0
        %1783 = vmatprep.subr.bf16.mxu0 0
        %1784 = vmatpush1.bf16.msra.mxu0 0
        %1785 = vmatprep.subr.bf16.mxu0 0
        %1786 = vmatpush1.bf16.msra.mxu0 0
        %1787 = vmatprep.subr.bf16.mxu0 0
        %1788 = vmatpush1.bf16.msra.mxu0 0
        %1789 = vmatprep.subr.bf16.mxu0 0
        %1790 = vmatpush1.bf16.msra.mxu0 0
        %1791 = vmatprep.subr.bf16.mxu0 0
        %1792 = vmatpush1.bf16.msra.mxu0 0
        %1793 = vmatprep.subr.bf16.mxu0 0
        %1794 = vmatpush1.bf16.msra.mxu0 0
        %1795 = vmatprep.subr.bf16.mxu0 0
        %1796 = vmatpush1.bf16.msra.mxu0 0
        %1797 = vmatprep.mubr.bf16.mxu0 0
        %1798 = vmatmul.mubr.bf16.gmra.mrb[0].mxu0 %v1760
        %v1799 = vpop.f32.mrb[0].mxu0
        %v1800 = vadd.f32 0.0, %v1799
        %v1801 = vpop.f32.mrb[0].mxu0
        %v1802 = vpop.f32.mrb[0].mxu0
        %v1803 = vpop.f32.mrb[0].mxu0
        %1804 = vdwg.mxu0
        %v1806 = vsel %vm1237, %v1662, 0
        %v1809 = vsel %vm1457, %v1666, 0
        %1811 = vmatprep.subr.bf16.mxu0 0
        %1812 = vmatpush1.bf16.msra.mxu0 %v1809
        %1813 = vmatprep.subr.bf16.mxu0 0
        %1814 = vmatpush1.bf16.msra.mxu0 0
        %1815 = vmatprep.subr.bf16.mxu0 0
        %1816 = vmatpush1.bf16.msra.mxu0 0
        %1817 = vmatprep.subr.bf16.mxu0 0
        %1818 = vmatpush1.bf16.msra.mxu0 0
        %1819 = vmatprep.subr.bf16.mxu0 0
        %1820 = vmatpush1.bf16.msra.mxu0 0
        %1821 = vmatprep.subr.bf16.mxu0 0
        %1822 = vmatpush1.bf16.msra.mxu0 0
        %1823 = vmatprep.subr.bf16.mxu0 0
        %1824 = vmatpush1.bf16.msra.mxu0 0
        %1825 = vmatprep.subr.bf16.mxu0 0
        %1826 = vmatpush1.bf16.msra.mxu0 0
        %1827 = vmatprep.subr.bf16.mxu0 0
        %1828 = vmatpush1.bf16.msra.mxu0 0
        %1829 = vmatprep.subr.bf16.mxu0 0
        %1830 = vmatpush1.bf16.msra.mxu0 0
        %1831 = vmatprep.subr.bf16.mxu0 0
        %1832 = vmatpush1.bf16.msra.mxu0 0
        %1833 = vmatprep.subr.bf16.mxu0 0
        %1834 = vmatpush1.bf16.msra.mxu0 0
        %1835 = vmatprep.subr.bf16.mxu0 0
        %1836 = vmatpush1.bf16.msra.mxu0 0
        %1837 = vmatprep.subr.bf16.mxu0 0
        %1838 = vmatpush1.bf16.msra.mxu0 0
        %1839 = vmatprep.subr.bf16.mxu0 0
        %1840 = vmatpush1.bf16.msra.mxu0 0
        %1841 = vmatprep.subr.bf16.mxu0 0
        %1842 = vmatpush1.bf16.msra.mxu0 0
        %1843 = vmatprep.mubr.bf16.mxu0 0
        %1844 = vmatmul.mubr.bf16.gmra.mrb[0].mxu0 %v1806
        %v1845 = vpop.f32.mrb[0].mxu0
        %v1846 = vadd.f32 0.0, %v1845
        %v1847 = vpop.f32.mrb[0].mxu0
        %v1848 = vpop.f32.mrb[0].mxu0
        %v1849 = vpop.f32.mrb[0].mxu0
        %1850 = vdwg.mxu0
        %v1851 = vadd.f32 %v1708, %v1754
        %v1852 = vadd.f32 %v1851, %v1800
        %v1853 = vadd.f32 %v1852, %v1846
        %v1854 = vld [vmem:[%s6] sm:$0x1]
        %v1856 = vlaneseq
        %v1857 = vshrl.u32 %v1856, 7
        %v1858 = vsub.s32 0, %v1857
        %v1859 = vrot.slane %v1854, %v1858
        %v1861 = vadd.f32 %v1853, %v1859
        %v1862 = vadd.f32 %v437, %v1861
        %v1863 = vld [vmem:[%s7] sm:$0x1]
        %v1864 = vld [vmem:[%s8] sm:$0x1]
        %v1865 = vsel %vm440, %v1862, 0.0
        %1866 = vadd.xlane.f32.xlu0 %v1865
        %v1867 = vpop.xlane.xlu0 %1866
        %v1868 = vmul.f32 %v1867, %v444
        %v1869 = vsub.f32 %v1862, %v1868
        %v1870 = vmul.f32 %v1869, %v1869
        %v1871 = vsel %vm440, %v1870, 0.0
        %1872 = vadd.xlane.f32.xlu0 %v1871
        %v1873 = vpop.xlane.xlu0 %1872
        %v1874 = vmul.f32 %v1873, %v444
        %v1875 = vadd.f32 %v1874, 1e-05
        %v1876 = vrsqrt.pop %v1875
        %v1877 = vmul.f32 %v1869, %v1876
        %v1879 = vlaneseq
        %v1880 = vshrl.u32 %v1879, 7
        %v1881 = vsub.s32 0, %v1880
        %v1882 = vrot.slane %v1863, %v1881
        %v1884 = vmul.f32 %v1877, %v1882
        %v1886 = vlaneseq
        %v1887 = vshrl.u32 %v1886, 7
        %v1888 = vsub.s32 0, %v1887
        %v1889 = vrot.slane %v1864, %v1888
        %v1891 = vadd.f32 %v1884, %v1889
        %v1892 = vpack.c.bf16 %v1891, %v1891
        %v1893 = vld [vmem:[%s9] sm:$0xf]
        %v1894 = vld [vmem:[%s9 + $0x4] sm:$0xf]
        %v1895 = vld [vmem:[%s9 + $0x8] sm:$0xf]
        %v1896 = vld [vmem:[%s9 + $0xc] sm:$0xf]
        %v1897 = vld [vmem:[%s10] sm:$0x1]
        %v1899 = vlaneseq
        %v1900 = vshrl.u32 %v1899, 7
        %v1901 = vsub.s32 0, %v1900
        %v1902 = vrot.slane %v1897, %v1901
        %v1908 = vunpack.c.l.b16 %v1893
        %v1909 = vunpack.c.l.b16 %v1894
        %v1910 = vunpack.c.l.b16 %v1895
        %v1911 = vunpack.c.l.b16 %v1896
        %v1912 = vpack.c.b16 %v1909, %v1908
        %v1913 = vpack.c.b16 %v1911, %v1910
        %v1917 = vsel %vm440, %v1892, 0
        %1919 = vmatprep.subr.bf16.mxu0 0
        %1920 = vmatpush1.bf16.msra.mxu0 %v1912
        %1921 = vmatprep.subr.bf16.mxu0 0
        %1922 = vmatpush1.bf16.msra.mxu0 %v1913
        %1923 = vmatprep.subr.bf16.mxu0 0
        %1924 = vmatpush1.bf16.msra.mxu0 0
        %1925 = vmatprep.subr.bf16.mxu0 0
        %1926 = vmatpush1.bf16.msra.mxu0 0
        %1927 = vmatprep.subr.bf16.mxu0 0
        %1928 = vmatpush1.bf16.msra.mxu0 0
        %1929 = vmatprep.subr.bf16.mxu0 0
        %1930 = vmatpush1.bf16.msra.mxu0 0
        %1931 = vmatprep.subr.bf16.mxu0 0
        %1932 = vmatpush1.bf16.msra.mxu0 0
        %1933 = vmatprep.subr.bf16.mxu0 0
        %1934 = vmatpush1.bf16.msra.mxu0 0
        %1935 = vmatprep.subr.bf16.mxu0 0
        %1936 = vmatpush1.bf16.msra.mxu0 0
        %1937 = vmatprep.subr.bf16.mxu0 0
        %1938 = vmatpush1.bf16.msra.mxu0 0
        %1939 = vmatprep.subr.bf16.mxu0 0
        %1940 = vmatpush1.bf16.msra.mxu0 0
        %1941 = vmatprep.subr.bf16.mxu0 0
        %1942 = vmatpush1.bf16.msra.mxu0 0
        %1943 = vmatprep.subr.bf16.mxu0 0
        %1944 = vmatpush1.bf16.msra.mxu0 0
        %1945 = vmatprep.subr.bf16.mxu0 0
        %1946 = vmatpush1.bf16.msra.mxu0 0
        %1947 = vmatprep.subr.bf16.mxu0 0
        %1948 = vmatpush1.bf16.msra.mxu0 0
        %1949 = vmatprep.subr.bf16.mxu0 0
        %1950 = vmatpush1.bf16.msra.mxu0 0
        %1951 = vmatprep.mubr.bf16.mxu0 0
        %1952 = vmatmul.mubr.bf16.gmra.mrb[0].mxu0 %v1917
        %v1953 = vpop.f32.mrb[0].mxu0
        %v1954 = vadd.f32 %v1902, %v1953
        %v1955 = vpop.f32.mrb[0].mxu0
        %v1956 = vpop.f32.mrb[0].mxu0
        %v1957 = vpop.f32.mrb[0].mxu0
        %1958 = vdwg.mxu0
        %v1959 = vmax.f32 %v1954, 0.0
        %v1960 = vpack.c.bf16 %v1959, %v1959
        %v1961 = vld [vmem:[%s11] sm:$0xf]
        %v1962 = vld [vmem:[%s11 + $0x4] sm:$0xf]
        %v1963 = vld [vmem:[%s11 + $0x8] sm:$0xf]
        %v1964 = vld [vmem:[%s11 + $0xc] sm:$0xf]
        %v1965 = vld [vmem:[%s11 + $0x10] sm:$0xf]
        %v1966 = vld [vmem:[%s11 + $0x14] sm:$0xf]
        %v1967 = vld [vmem:[%s11 + $0x18] sm:$0xf]
        %v1968 = vld [vmem:[%s11 + $0x1c] sm:$0xf]
        %v1969 = vld [vmem:[%s12] sm:$0x1]
        %v1971 = vlaneseq
        %v1972 = vshrl.u32 %v1971, 7
        %v1973 = vsub.s32 0, %v1972
        %v1974 = vrot.slane %v1969, %v1973
        %v1984 = vunpack.c.l.b16 %v1961
        %v1985 = vunpack.c.l.b16 %v1962
        %v1986 = vunpack.c.l.b16 %v1963
        %v1987 = vunpack.c.l.b16 %v1964
        %v1988 = vunpack.c.l.b16 %v1965
        %v1989 = vunpack.c.l.b16 %v1966
        %v1990 = vunpack.c.l.b16 %v1967
        %v1991 = vunpack.c.l.b16 %v1968
        %v1992 = vpack.c.b16 %v1985, %v1984
        %v1993 = vpack.c.b16 %v1987, %v1986
        %v1994 = vpack.c.b16 %v1989, %v1988
        %v1995 = vpack.c.b16 %v1991, %v1990
        %vm2000 = vcmask 523264
        %v2002 = vsel %vm2000, %v1960, 0
        %2004 = vmatprep.subr.bf16.mxu0 0
        %2005 = vmatpush1.bf16.msra.mxu0 %v1992
        %2006 = vmatprep.subr.bf16.mxu0 0
        %2007 = vmatpush1.bf16.msra.mxu0 %v1993
        %2008 = vmatprep.subr.bf16.mxu0 0
        %2009 = vmatpush1.bf16.msra.mxu0 %v1994
        %2010 = vmatprep.subr.bf16.mxu0 0
        %2011 = vmatpush1.bf16.msra.mxu0 %v1995
        %2012 = vmatprep.subr.bf16.mxu0 0
        %2013 = vmatpush1.bf16.msra.mxu0 0
        %2014 = vmatprep.subr.bf16.mxu0 0
        %2015 = vmatpush1.bf16.msra.mxu0 0
        %2016 = vmatprep.subr.bf16.mxu0 0
        %2017 = vmatpush1.bf16.msra.mxu0 0
        %2018 = vmatprep.subr.bf16.mxu0 0
        %2019 = vmatpush1.bf16.msra.mxu0 0
        %2020 = vmatprep.subr.bf16.mxu0 0
        %2021 = vmatpush1.bf16.msra.mxu0 0
        %2022 = vmatprep.subr.bf16.mxu0 0
        %2023 = vmatpush1.bf16.msra.mxu0 0
        %2024 = vmatprep.subr.bf16.mxu0 0
        %2025 = vmatpush1.bf16.msra.mxu0 0
        %2026 = vmatprep.subr.bf16.mxu0 0
        %2027 = vmatpush1.bf16.msra.mxu0 0
        %2028 = vmatprep.subr.bf16.mxu0 0
        %2029 = vmatpush1.bf16.msra.mxu0 0
        %2030 = vmatprep.subr.bf16.mxu0 0
        %2031 = vmatpush1.bf16.msra.mxu0 0
        %2032 = vmatprep.subr.bf16.mxu0 0
        %2033 = vmatpush1.bf16.msra.mxu0 0
        %2034 = vmatprep.subr.bf16.mxu0 0
        %2035 = vmatpush1.bf16.msra.mxu0 0
        %2036 = vmatprep.mubr.bf16.mxu0 0
        %2037 = vmatmul.mubr.bf16.gmra.mrb[0].mxu0 %v2002
        %v2038 = vpop.f32.mrb[0].mxu0
        %v2039 = vadd.f32 %v1974, %v2038
        %v2040 = vpop.f32.mrb[0].mxu0
        %v2041 = vpop.f32.mrb[0].mxu0
        %v2042 = vpop.f32.mrb[0].mxu0
        %2043 = vdwg.mxu0
        %v2044 = vadd.f32 %v1862, %v2039
        %2045 = vst.msk [vmem:[%s431] sm:$0xff] %vm440, %v2044
        %s2046 = sand.u32 %s313, 1
        %s2047 = scalar_lea.sflag [#allocation3], %s2046
        %s2048 = sand.u32 %s313, 1
        %s2049 = smul.addr %s2048, 8
        %s2050 = scalar_lea.vmem [#allocation2], %s2049
        // Predicated region
        $region73: #{tpu_custom_call.1} parent=71 // pred_check
          %p2051 = pneg %p323
        $region74: #{tpu_custom_call.1} parent=71 // pred_check_branch
          %2053 = sbr.rel (%p2051) target = $region76
        $region75: #{tpu_custom_call.1} parent=71 // pred_region
          %s2055 = ssub.s32 128, 128
          %2056 = vsyncadd %s2047, %s2055
          %s2057 = smul.addr %s27, 128
          %s2058 = scalar_lea.hbm %s13, %s2057
          %s2060 = sshll.u32 %s2050, 4
          %s2061 = int_to_ptr.vmem [resolvable:$true] %s2060
          %2063 = dma.vmem_to_hbm [thread:$0]  %s2061, 128, %s2058, %s2047
        $region76: #{tpu_custom_call.1} parent=71 // pred_fallthru
          _
      $region72: #{tpu_custom_call.1} parent=5 // pred_fallthru
        _
      %p2064 = scmp.le.s32.totalorder 2, %s22
      // Predicated region
      $region77: #{tpu_custom_call.1} parent=5 // pred_check
        %p2065 = pneg %p2064
      $region78: #{tpu_custom_call.1} parent=5 // pred_check_branch
        %2067 = sbr.rel (%p2065) target = $region80
      $region79: #{tpu_custom_call.1} parent=5 // pred_region
        %s2068 = ssub.s32 %s22, 2
        // Predicated region
        $region81: #{tpu_custom_call.1} parent=79 // pred_check
          %p2069 = pneg %p329
        $region82: #{tpu_custom_call.1} parent=79 // pred_check_branch
          %2071 = sbr.rel (%p2069) target = $region84
        $region83: #{tpu_custom_call.1} parent=79 // pred_region
          %s2072 = sand.u32 %s314, 1
          %s2073 = scalar_lea.sflag [#allocation3], %s2072
          %s2074 = sand.u32 %s314, 1
          %s2075 = smul.addr %s2074, 8
          %s2076 = scalar_lea.vmem [#allocation2], %s2075
          %2077 = dma.done %s2073, 128
        $region84: #{tpu_custom_call.1} parent=79 // pred_fallthru
          _
      $region80: #{tpu_custom_call.1} parent=5 // pred_fallthru
        _
    $region6: #{tpu_custom_call.1} parent=1 // loop_footer
      %s26 = sadd.s32 1, %s22
    $region7: #{tpu_custom_call.1} parent=1 // loop_footer_branch
      %21 = sbr.rel target = $region3
    $region8: #{tpu_custom_call.1} parent=1 // loop_exit
      _
    %2078 = vsyncpa [#allocation3], 1
    %s2079 = scalar_lea.sflag [#allocation3], 1
    %2080 = vsyncpa %s2079, 1

</llo_original>
